<compile_context>
chip_gen: v7x
topology: tpu7x:2x2x1
jax: 0.10.0
libtpu: 0.0.40
codegen_flags: <defaults>
</compile_context>

<pallas_src>
import functools

import jax
import jax.numpy as jnp
from jax import lax
from jax.experimental import pallas as pl
from jax.experimental.pallas import tpu as pltpu


# --------------------------------------------------------------------------- #
# Kernel body (one grid step == G independent problems, row-stacked)
# --------------------------------------------------------------------------- #
def _word_emb_iwe_kernel(sample_ref,   # (G*B, F)      candidate word features
                         ctx_ref,      # (G, L+2p, F)  "same"-padded contexts
                         lwt_ref,      # (F, E)        Linear weight (pre-T)
                         lb_ref,       # (1, E)        Linear bias
                         cwm_ref,      # (W*F, E)      Conv1d weight, tap-major
                         cb_ref,       # (1, E)        Conv1d bias
                         gamma_ref,    # (1, 1) SMEM   gamma scale
                         loss_ref,     # (G, 1)        -log_softmax(sim)[0]
                         wrep_ref,     # (G*B, E)      word_rep
                         *, G, B, L, W, F):
    E = lwt_ref.shape[1]

    # --- word embeddings: one row-stacked MXU dot ---------------------------
    wr = jnp.tanh(
        jnp.dot(sample_ref[...], lwt_ref[...],
                preferred_element_type=jnp.float32)
        + lb_ref[...])                                          # (G*B, E)
    wrep_ref[...] = wr

    # --- context embeddings: "same" Conv1d as W shifted row-stacked dots ----
    ctx = ctx_ref[...]                                          # (G, L+2p, F)

    def tap(w):
        win = ctx[:, w:w + L, :].reshape(G * L, F)              # shifted window
        return jnp.dot(win, cwm_ref[w * F:(w + 1) * F, :],
                       preferred_element_type=jnp.float32)      # (G*L, E)

    conv = tap(0)
    for w in range(1, W):                                       # static unroll
        conv = conv + tap(w)
    conv = conv + cb_ref[...]                                   # (G*L, E)
    ctx_rep = jnp.max(conv.reshape(G, L, E), axis=1)            # (G, E)

    # --- cosine similarity (dim=1, eps=1e-8), gamma, log-softmax (dim=0) ----
    # Vectorized across problems: problems on sublanes, candidates on lanes.
    wr3 = wr.reshape(G, B, E)
    dots = jnp.sum(wr3 * ctx_rep[:, None, :], axis=-1)          # (G, B)
    w2 = jnp.sum(wr3 * wr3, axis=-1)                            # (G, B)
    c2 = jnp.sum(ctx_rep * ctx_rep, axis=-1, keepdims=True)     # (G, 1)
    # torch cosine_similarity: dot / (max(||w||,1e-8) * max(||c||,1e-8))
    inv_wn = jnp.minimum(lax.rsqrt(w2), 1e8)                    # EUP
    inv_cn = jnp.minimum(lax.rsqrt(c2), 1e8)                    # EUP
    sim = dots * inv_wn * inv_cn * gamma_ref[0, 0]              # (G, B)

    m = jnp.max(sim, axis=1, keepdims=True)                     # (G, 1)
    lse = m + jnp.log(jnp.sum(jnp.exp(sim - m), axis=1, keepdims=True))
    loss_ref[...] = lse - sim[:, 0:1]                           # (G, 1)


# --------------------------------------------------------------------------- #
# Wrappers
# --------------------------------------------------------------------------- #
def prepare_params(lin_w, lin_b, conv_w, conv_b):
    """One-time parameter prep (hoist out of the per-step path).

    lin_w (E, F), lin_b (E,), conv_w (E, F, W), conv_b (E,)
    Returns lin_w_t (F, E), lin_b2 (1, E), conv_w_mat (W*F, E), conv_b2 (1, E).
    """
    E, F, W = conv_w.shape
    lin_w_t = jnp.asarray(lin_w, jnp.float32).T                       # (F, E)
    conv_w_mat = jnp.transpose(jnp.asarray(conv_w, jnp.float32),
                               (2, 1, 0)).reshape(W * F, E)           # (W*F, E)
    lin_b2 = jnp.asarray(lin_b, jnp.float32).reshape(1, E)
    conv_b2 = jnp.asarray(conv_b, jnp.float32).reshape(1, E)
    return lin_w_t, lin_b2, conv_w_mat, conv_b2


def _choose_fold(n, max_per_step=1024):
    """Problems folded per grid step.

    Multiple of 8 (keeps sublane block dims aligned); for large N keep >= 2
    steps so v7x's two TensorCores both get work.  VMEM is a non-issue even at
    the cap (~few MB per buffer vs 32 MiB default scoped limit).
    """
    g = -(-n // 2) if n >= 16 else n
    g = -(-g // 8) * 8
    return min(g, max_per_step)


def _batched_core(sample_words, context_words, lin_w_t, lin_b2,
                  conv_w_mat, conv_b2, gamma):
    """N independent problems, folded G per grid step.

    sample_words  : (N, B, F)
    context_words : (N, L, F)
    Returns losses (N,), word_reps (N, B, E).
    """
    N, B, F = sample_words.shape
    _, L, _ = context_words.shape
    WF, E = conv_w_mat.shape
    W = WF // F
    # TODO(synk): symmetric p=(W-1)//2 matches PyTorch 'same' only for odd W.
    p = (W - 1) // 2
    Lp = L + 2 * p

    G = _choose_fold(N)
    S = -(-N // G)
    N_pad = S * G

    sample = jnp.asarray(sample_words, jnp.float32)
    ctx = jnp.asarray(context_words, jnp.float32)
    if N_pad != N:                       # zero-pad dummy problems (finite math)
        sample = jnp.pad(sample, ((0, N_pad - N), (0, 0), (0, 0)))
        ctx = jnp.pad(ctx, ((0, N_pad - N), (0, 0), (0, 0)))
    ctx_pad = jnp.pad(ctx, ((0, 0), (p, p), (0, 0)))              # (N_pad,Lp,F)
    sample_flat = sample.reshape(N_pad * B, F)                    # row-stack
    gamma_arr = jnp.asarray(gamma, jnp.float32).reshape(1, 1)

    kernel = functools.partial(_word_emb_iwe_kernel, G=G, B=B, L=L, W=W, F=F)

    loss2, wrep2 = pl.pallas_call(
        kernel,
        out_shape=(jax.ShapeDtypeStruct((N_pad, 1), jnp.float32),
                   jax.ShapeDtypeStruct((N_pad * B, E), jnp.float32)),
        grid=(S,),
        in_specs=[
            pl.BlockSpec((G * B, F), lambda s: (s, 0)),           # samples
            pl.BlockSpec((G, Lp, F), lambda s: (s, 0, 0)),        # padded ctx
            pl.BlockSpec((F, E), lambda s: (0, 0)),               # lin_w_t
            pl.BlockSpec((1, E), lambda s: (0, 0)),               # lin_b
            pl.BlockSpec((WF, E), lambda s: (0, 0)),              # conv_w_mat
            pl.BlockSpec((1, E), lambda s: (0, 0)),               # conv_b
            pl.BlockSpec((1, 1), lambda s: (0, 0),
                         memory_space=pltpu.MemorySpace.SMEM),    # gamma scalar
        ],
        out_specs=(
            pl.BlockSpec((G, 1), lambda s: (s, 0)),               # loss
            pl.BlockSpec((G * B, E), lambda s: (s, 0)),           # word_rep
        ),
        compiler_params=pltpu.CompilerParams(
            dimension_semantics=("parallel",)),                   # 2 TCs on v7x
    )(sample_flat, ctx_pad, lin_w_t, lin_b2, conv_w_mat, conv_b2, gamma_arr)

    losses = loss2[:N, 0]
    wreps = wrep2.reshape(N_pad, B, E)[:N]
    return losses, wreps


# Per-step entry point when parameter prep has been hoisted (preferred).
word_emb_iwe_batched = jax.jit(_batched_core)


@jax.jit
def _single_forward(sample_word, context_words, lin_w, lin_b, conv_w, conv_b,
                    gamma):
    lin_w_t, lin_b2, conv_w_mat, conv_b2 = prepare_params(
        lin_w, lin_b, conv_w, conv_b)
    losses, wreps = _batched_core(sample_word[None], context_words[None],
                                  lin_w_t, lin_b2, conv_w_mat, conv_b2, gamma)
    return losses[0], wreps[0]


def word_emb_iwe_forward(sample_word, context_words, lin_w, lin_b,
                         conv_w, conv_b, gamma, last_epoch=False):
    """Module-faithful single-problem forward (N=1 case of the batched path)."""
    loss, word_rep = _single_forward(sample_word, context_words,
                                     lin_w, lin_b, conv_w, conv_b, gamma)
    if last_epoch:
        return loss, word_rep, conv_w
    return loss, word_rep, None


# --------------------------------------------------------------------------- #
# Pure-JAX reference (matches PyTorch semantics)
# --------------------------------------------------------------------------- #
def reference_forward(sample_word, context_words, lin_w, lin_b,
                      conv_w, conv_b, gamma):
    E, F, W = conv_w.shape
    L = context_words.shape[0]
    p = (W - 1) // 2
    ctx_pad = jnp.pad(context_words, ((p, p), (0, 0)))
    acc = jnp.zeros((L, E), jnp.float32)
    for w in range(W):
        acc = acc + ctx_pad[w:w + L] @ conv_w[:, :, w].T
    acc = acc + conv_b[None, :]
    ctx_rep = acc.max(axis=0)                                  # (E,)
    wr = jnp.tanh(sample_word @ lin_w.T + lin_b[None, :])      # (B, E)
    num = wr @ ctx_rep
    den = jnp.maximum(jnp.linalg.norm(wr, axis=1), 1e-8) * \
          jnp.maximum(jnp.linalg.norm(ctx_rep), 1e-8)
    sim = gamma * num / den
    obj = sim - jax.scipy.special.logsumexp(sim)
    return -obj[0], wr


# --------------------------------------------------------------------------- #
if __name__ == "__main__":
    feature_dim, emb_dim, window_size, hidden_size, gamma = 32, 32, 3, 64, 10.0
    # TODO(synk): hidden_size is declared in the module __init__ but unused by forward.
    B, L, N = 8, 16, 16  # candidates (row 0 = positive), context length, problems

    key = jax.random.PRNGKey(0)
    k1, k2, k3, k4, k5, k6 = jax.random.split(key, 6)

    lin_bound = 1.0 / (feature_dim ** 0.5)
    lin_w = jax.random.uniform(k1, (emb_dim, feature_dim), jnp.float32,
                               -lin_bound, lin_bound)
    lin_b = jax.random.uniform(k2, (emb_dim,), jnp.float32, -lin_bound, lin_bound)
    conv_bound = 1.0 / ((feature_dim * window_size) ** 0.5)
    conv_w = jax.random.uniform(k3, (emb_dim, feature_dim, window_size),
                                jnp.float32, -conv_bound, conv_bound)
    conv_b = jax.random.uniform(k4, (emb_dim,), jnp.float32,
                                -conv_bound, conv_bound)

    sample_word = jax.random.normal(k5, (B, feature_dim), jnp.float32)
    context_words = jax.random.normal(k6, (L, feature_dim), jnp.float32)

    # --- single-problem forward (module API) --------------------------------
    loss, word_rep, conv_weight = word_emb_iwe_forward(
        sample_word, context_words, lin_w, lin_b, conv_w, conv_b, gamma,
        last_epoch=True)
    jax.block_until_ready((loss, word_rep, conv_weight))

    ref_loss, ref_wr = reference_forward(
        sample_word, context_words, lin_w, lin_b, conv_w, conv_b, gamma)
    assert jnp.allclose(loss, ref_loss, atol=1e-5, rtol=1e-5), (loss, ref_loss)
    assert jnp.allclose(word_rep, ref_wr, atol=1e-5, rtol=1e-5)
    assert conv_weight.shape == (emb_dim, feature_dim, window_size)

    # --- batched forward: N problems, G folded per grid step ----------------
    ks, kc = jax.random.split(jax.random.PRNGKey(1))
    sample_b = jax.random.normal(ks, (N, B, feature_dim), jnp.float32)
    context_b = jax.random.normal(kc, (N, L, feature_dim), jnp.float32)

    lin_w_t, lin_b2, conv_w_mat, conv_b2 = prepare_params(
        lin_w, lin_b, conv_w, conv_b)          # hoisted off the per-step path
    losses, wreps = word_emb_iwe_batched(
        sample_b, context_b, lin_w_t, lin_b2, conv_w_mat, conv_b2, gamma)
    jax.block_until_ready((losses, wreps))

    for n in range(N):
        rl, rw = reference_forward(sample_b[n], context_b[n],
                                   lin_w, lin_b, conv_w, conv_b, gamma)
        assert jnp.allclose(losses[n], rl, atol=1e-5, rtol=1e-5), (n, losses[n], rl)
        assert jnp.allclose(wreps[n], rw, atol=1e-5, rtol=1e-5), n

    print("KERNEL_OK")
</pallas_src>

<mosaic_0001>
module attributes {stable_mosaic.version = 11 : i64} {
  func.func @_word_emb_iwe_kernel(%arg0: i32, %arg1: memref<64x32xf32, #tpu.memory_space<vmem>>, %arg2: memref<8x18x32xf32, #tpu.memory_space<vmem>>, %arg3: memref<32x32xf32, #tpu.memory_space<vmem>>, %arg4: memref<1x32xf32, #tpu.memory_space<vmem>>, %arg5: memref<96x32xf32, #tpu.memory_space<vmem>>, %arg6: memref<1x32xf32, #tpu.memory_space<vmem>>, %arg7: memref<1x1xf32, #tpu.memory_space<smem>>, %arg8: memref<8x1xf32, #tpu.memory_space<vmem>>, %arg9: memref<64x32xf32, #tpu.memory_space<vmem>>) attributes {dimension_semantics = [#tpu.dimension_semantics<parallel>], iteration_bounds = array<i64: 1>, scalar_prefetch = 0 : i64, scratch_operands = 0 : i64, tpu.core_type = #tpu.core_type<tc>, window_params = [{transform_indices = @transform_0, window_bounds = array<i64: 64, 32>}, {transform_indices = @transform_1, window_bounds = array<i64: 8, 18, 32>}, {pipeline_mode = #tpu.pipeline_mode<synchronous>, transform_indices = @transform_2, window_bounds = array<i64: 32, 32>}, {pipeline_mode = #tpu.pipeline_mode<synchronous>, transform_indices = @transform_3, window_bounds = array<i64: 1, 32>}, {pipeline_mode = #tpu.pipeline_mode<synchronous>, transform_indices = @transform_4, window_bounds = array<i64: 96, 32>}, {pipeline_mode = #tpu.pipeline_mode<synchronous>, transform_indices = @transform_5, window_bounds = array<i64: 1, 32>}, {transform_indices = @transform_6, window_bounds = array<i64: 1, 1>}, {transform_indices = @transform_7, window_bounds = array<i64: 8, 1>}, {transform_indices = @transform_8, window_bounds = array<i64: 64, 32>}]} {
    %c0 = arith.constant 0 : index
    %c0_0 = arith.constant 0 : index
    %0 = vector.load %arg1[%c0, %c0_0] : memref<64x32xf32, #tpu.memory_space<vmem>>, vector<64x32xf32>
    %c0_1 = arith.constant 0 : index
    %c0_2 = arith.constant 0 : index
    %1 = vector.load %arg3[%c0_1, %c0_2] : memref<32x32xf32, #tpu.memory_space<vmem>>, vector<32x32xf32>
    %cst = arith.constant dense<0.000000e+00> : vector<64x32xf32>
    %2 = tpu.matmul %0, %1, %cst {dimension_numbers = #tpu.dot_dimension_numbers<[1], [0], [0], [1], [0, 0, 1, 1], [], []>} : vector<64x32xf32>, vector<32x32xf32>, vector<64x32xf32> -> vector<64x32xf32>
    %c0_3 = arith.constant 0 : index
    %c0_4 = arith.constant 0 : index
    %3 = vector.load %arg4[%c0_3, %c0_4] : memref<1x32xf32, #tpu.memory_space<vmem>>, vector<1x32xf32>
    %4 = vector.broadcast %3 : vector<1x32xf32> to vector<64x32xf32>
    %5 = arith.addf %2, %4 : vector<64x32xf32>
    %6 = math.tanh %5 : vector<64x32xf32>
    %c0_5 = arith.constant 0 : index
    %c0_6 = arith.constant 0 : index
    %7 = vector.load %arg9[%c0_5, %c0_6] : memref<64x32xf32, #tpu.memory_space<vmem>>, vector<64x32xf32>
    tpu.vector_store %arg9[%c0_5, %c0_6], %6 {strides = array<i32>} : memref<64x32xf32, #tpu.memory_space<vmem>>, vector<64x32xf32>,
    %c0_7 = arith.constant 0 : index
    %c0_8 = arith.constant 0 : index
    %c0_9 = arith.constant 0 : index
    %8 = vector.load %arg2[%c0_7, %c0_8, %c0_9] : memref<8x18x32xf32, #tpu.memory_space<vmem>>, vector<8x18x32xf32>
    %9 = vector.extract_strided_slice %8 {offsets = [0, 0, 0], sizes = [8, 16, 32], strides = [1, 1, 1]} : vector<8x18x32xf32> to vector<8x16x32xf32>
    %10 = vector.shape_cast %9 : vector<8x16x32xf32> to vector<128x32xf32>
    %c0_10 = arith.constant 0 : index
    %c0_11 = arith.constant 0 : index
    %11 = vector.load %arg5[%c0_10, %c0_11] : memref<96x32xf32, #tpu.memory_space<vmem>>, vector<32x32xf32>
    %cst_12 = arith.constant dense<0.000000e+00> : vector<128x32xf32>
    %12 = tpu.matmul %10, %11, %cst_12 {dimension_numbers = #tpu.dot_dimension_numbers<[1], [0], [0], [1], [0, 0, 1, 1], [], []>} : vector<128x32xf32>, vector<32x32xf32>, vector<128x32xf32> -> vector<128x32xf32>
    %13 = vector.extract_strided_slice %8 {offsets = [0, 1, 0], sizes = [8, 16, 32], strides = [1, 1, 1]} : vector<8x18x32xf32> to vector<8x16x32xf32>
    %14 = vector.shape_cast %13 : vector<8x16x32xf32> to vector<128x32xf32>
    %c32 = arith.constant 32 : index
    %c0_13 = arith.constant 0 : index
    %15 = vector.load %arg5[%c32, %c0_13] : memref<96x32xf32, #tpu.memory_space<vmem>>, vector<32x32xf32>
    %cst_14 = arith.constant dense<0.000000e+00> : vector<128x32xf32>
    %16 = tpu.matmul %14, %15, %cst_14 {dimension_numbers = #tpu.dot_dimension_numbers<[1], [0], [0], [1], [0, 0, 1, 1], [], []>} : vector<128x32xf32>, vector<32x32xf32>, vector<128x32xf32> -> vector<128x32xf32>
    %17 = arith.addf %12, %16 : vector<128x32xf32>
    %18 = vector.extract_strided_slice %8 {offsets = [0, 2, 0], sizes = [8, 16, 32], strides = [1, 1, 1]} : vector<8x18x32xf32> to vector<8x16x32xf32>
    %19 = vector.shape_cast %18 : vector<8x16x32xf32> to vector<128x32xf32>
    %c64 = arith.constant 64 : index
    %c0_15 = arith.constant 0 : index
    %20 = vector.load %arg5[%c64, %c0_15] : memref<96x32xf32, #tpu.memory_space<vmem>>, vector<32x32xf32>
    %cst_16 = arith.constant dense<0.000000e+00> : vector<128x32xf32>
    %21 = tpu.matmul %19, %20, %cst_16 {dimension_numbers = #tpu.dot_dimension_numbers<[1], [0], [0], [1], [0, 0, 1, 1], [], []>} : vector<128x32xf32>, vector<32x32xf32>, vector<128x32xf32> -> vector<128x32xf32>
    %22 = arith.addf %17, %21 : vector<128x32xf32>
    %c0_17 = arith.constant 0 : index
    %c0_18 = arith.constant 0 : index
    %23 = vector.load %arg6[%c0_17, %c0_18] : memref<1x32xf32, #tpu.memory_space<vmem>>, vector<1x32xf32>
    %24 = vector.broadcast %23 : vector<1x32xf32> to vector<128x32xf32>
    %25 = arith.addf %22, %24 : vector<128x32xf32>
    %26 = vector.shape_cast %25 : vector<128x32xf32> to vector<8x16x32xf32>
    %cst_19 = arith.constant dense<0xFF800000> : vector<8x32xf32>
    %27 = vector.multi_reduction <maximumf>, %26, %cst_19 [1] : vector<8x16x32xf32> to vector<8x32xf32>
    %28 = vector.shape_cast %6 : vector<64x32xf32> to vector<8x8x32xf32>
    %29 = vector.shape_cast %27 : vector<8x32xf32> to vector<8x1x32xf32>
    %30 = vector.broadcast %29 : vector<8x1x32xf32> to vector<8x8x32xf32>
    %31 = arith.mulf %28, %30 : vector<8x8x32xf32>
    %cst_20 = arith.constant dense<0.000000e+00> : vector<8x8xf32>
    %32 = vector.multi_reduction <add>, %31, %cst_20 [2] : vector<8x8x32xf32> to vector<8x8xf32>
    %33 = arith.mulf %28, %28 : vector<8x8x32xf32>
    %cst_21 = arith.constant dense<0.000000e+00> : vector<8x8xf32>
    %34 = vector.multi_reduction <add>, %33, %cst_21 [2] : vector<8x8x32xf32> to vector<8x8xf32>
    %35 = arith.mulf %27, %27 : vector<8x32xf32>
    %cst_22 = arith.constant dense<0.000000e+00> : vector<8xf32>
    %36 = vector.multi_reduction <add>, %35, %cst_22 [1] : vector<8x32xf32> to vector<8xf32>
    %37 = vector.shape_cast %36 : vector<8xf32> to vector<8x1xf32>
    %38 = math.rsqrt %34 : vector<8x8xf32>
    %cst_23 = arith.constant 1.000000e+08 : f32
    %39 = vector.broadcast %cst_23 : f32 to vector<8x8xf32>
    %40 = arith.minimumf %38, %39 : vector<8x8xf32>
    %41 = math.rsqrt %37 : vector<8x1xf32>
    %cst_24 = arith.constant 1.000000e+08 : f32
    %42 = vector.broadcast %cst_24 : f32 to vector<8x1xf32>
    %43 = arith.minimumf %41, %42 : vector<8x1xf32>
    %44 = arith.mulf %32, %40 : vector<8x8xf32>
    %45 = vector.broadcast %43 : vector<8x1xf32> to vector<8x8xf32>
    %46 = arith.mulf %44, %45 : vector<8x8xf32>
    %c0_25 = arith.constant 0 : index
    %c0_26 = arith.constant 0 : index
    %47 = memref.load %arg7[%c0_25, %c0_26] : memref<1x1xf32, #tpu.memory_space<smem>>
    %48 = vector.broadcast %47 : f32 to vector<8x8xf32>
    %49 = arith.mulf %46, %48 : vector<8x8xf32>
    %cst_27 = arith.constant dense<0xFF800000> : vector<8xf32>
    %50 = vector.multi_reduction <maximumf>, %49, %cst_27 [1] : vector<8x8xf32> to vector<8xf32>
    %51 = vector.shape_cast %50 : vector<8xf32> to vector<8x1xf32>
    %52 = vector.broadcast %51 : vector<8x1xf32> to vector<8x8xf32>
    %53 = arith.subf %49, %52 : vector<8x8xf32>
    %54 = math.exp %53 : vector<8x8xf32>
    %cst_28 = arith.constant dense<0.000000e+00> : vector<8xf32>
    %55 = vector.multi_reduction <add>, %54, %cst_28 [1] : vector<8x8xf32> to vector<8xf32>
    %56 = vector.shape_cast %55 : vector<8xf32> to vector<8x1xf32>
    %57 = math.log %56 : vector<8x1xf32>
    %58 = arith.addf %51, %57 : vector<8x1xf32>
    %59 = vector.extract_strided_slice %49 {offsets = [0, 0], sizes = [8, 1], strides = [1, 1]} : vector<8x8xf32> to vector<8x1xf32>
    %60 = arith.subf %58, %59 : vector<8x1xf32>
    %c0_29 = arith.constant 0 : index
    %c0_30 = arith.constant 0 : index
    %61 = vector.load %arg8[%c0_29, %c0_30] : memref<8x1xf32, #tpu.memory_space<vmem>>, vector<8x1xf32>
    tpu.vector_store %arg8[%c0_29, %c0_30], %60 {strides = array<i32>} : memref<8x1xf32, #tpu.memory_space<vmem>>, vector<8x1xf32>,
    return
  }
  func.func @transform_0(%arg0: i32) -> (i32, i32) {
    %c0_i32 = arith.constant 0 : i32
    %c0_i32_0 = arith.constant 0 : i32
    return %arg0, %c0_i32 : i32, i32
  }
  func.func @transform_1(%arg0: i32) -> (i32, i32, i32) {
    %c0_i32 = arith.constant 0 : i32
    %c0_i32_0 = arith.constant 0 : i32
    %c0_i32_1 = arith.constant 0 : i32
    return %arg0, %c0_i32, %c0_i32_0 : i32, i32, i32
  }
  func.func @transform_2(%arg0: i32) -> (i32, i32) {
    %c0_i32 = arith.constant 0 : i32
    %c0_i32_0 = arith.constant 0 : i32
    %c0_i32_1 = arith.constant 0 : i32
    return %c0_i32, %c0_i32_0 : i32, i32
  }
  func.func @transform_3(%arg0: i32) -> (i32, i32) {
    %c0_i32 = arith.constant 0 : i32
    %c0_i32_0 = arith.constant 0 : i32
    %c0_i32_1 = arith.constant 0 : i32
    return %c0_i32, %c0_i32_0 : i32, i32
  }
  func.func @transform_4(%arg0: i32) -> (i32, i32) {
    %c0_i32 = arith.constant 0 : i32
    %c0_i32_0 = arith.constant 0 : i32
    %c0_i32_1 = arith.constant 0 : i32
    return %c0_i32, %c0_i32_0 : i32, i32
  }
  func.func @transform_5(%arg0: i32) -> (i32, i32) {
    %c0_i32 = arith.constant 0 : i32
    %c0_i32_0 = arith.constant 0 : i32
    %c0_i32_1 = arith.constant 0 : i32
    return %c0_i32, %c0_i32_0 : i32, i32
  }
  func.func @transform_6(%arg0: i32) -> (i32, i32) {
    %c0_i32 = arith.constant 0 : i32
    %c0_i32_0 = arith.constant 0 : i32
    %c0_i32_1 = arith.constant 0 : i32
    return %c0_i32, %c0_i32_0 : i32, i32
  }
  func.func @transform_7(%arg0: i32) -> (i32, i32) {
    %c0_i32 = arith.constant 0 : i32
    %c0_i32_0 = arith.constant 0 : i32
    return %arg0, %c0_i32 : i32, i32
  }
  func.func @transform_8(%arg0: i32) -> (i32, i32) {
    %c0_i32 = arith.constant 0 : i32
    %c0_i32_0 = arith.constant 0 : i32
    return %arg0, %c0_i32 : i32, i32
  }
}

</mosaic_0001>

<llo_original>
// kernel: _single_forward.1
$region0: #{_single_forward.1}
  #allocation0 [shape = 'u32[]', space=smem, size = 0x4, offset = 0x4, fixed_abs, tag = 'smem constant byte address 0x4 - core index']
  #allocation1 [shape = 'u32[144,128]{1,0:T(1,128)}', space=vmem, size = 0x12000, scoped, tag = 'internal scratch']
  #allocation2 [shape = 'f32[1,1]{1,0:T(1,128)S(6)}', space=smem, size = 0x200, scoped, tag = 'scoped memory for _single_forward.1']
  %s0 = inlined_call_operand.vmem [shape: f32[64,32], index: 0, kind: input, shape index: {}]
  %s1 = inlined_call_operand.vmem [shape: f32[8,18,32], index: 1, kind: input, shape index: {}]
  %s2 = inlined_call_operand.vmem [shape: f32[32,32], index: 2, kind: input, shape index: {}]
  %s3 = inlined_call_operand.vmem [shape: f32[1,32], index: 3, kind: input, shape index: {}]
  %s4 = inlined_call_operand.vmem [shape: f32[96,32], index: 4, kind: input, shape index: {}]
  %s5 = inlined_call_operand.vmem [shape: f32[1,32], index: 5, kind: input, shape index: {}]
  %s6 = inlined_call_operand.<no memory space> [shape: f32[1,1], index: 6, kind: input, shape index: {}]
  %s7 = inlined_call_operand.vmem [shape: f32[8,1], index: 7, kind: output, shape index: {0}]
  %s8 = inlined_call_operand.vmem [shape: f32[64,32], index: 8, kind: output, shape index: {1}]
  %9 = xla_tuple %s7, %s8
  %s10 = sld [smem:[#allocation0]]
  $region46: #{_single_forward.1} parent=0
    _
  %s12 = ssub.s32 1, %s10
  %s13 = scalar_select 0, %s12, %s10
  %14 = sst [smem:[#allocation2]] %s6
  // Predicated region
  $region2: #{_single_forward.1} parent=0 // pred_check
    _
  $region3: #{_single_forward.1} parent=0 // pred_check_branch
    %16 = sbr.rel (0) target = $region5
  $region4: #{_single_forward.1} parent=0 // pred_region
    _
  $region5: #{_single_forward.1} parent=0 // pred_fallthru
    _
  // Predicated region
  $region6: #{_single_forward.1} parent=0 // pred_check
    _
  $region7: #{_single_forward.1} parent=0 // pred_check_branch
    %18 = sbr.rel (0) target = $region9
  $region8: #{_single_forward.1} parent=0 // pred_region
    _
  $region9: #{_single_forward.1} parent=0 // pred_fallthru
    _
  // Predicated region
  $region10: #{_single_forward.1} parent=0 // pred_check
    _
  $region11: #{_single_forward.1} parent=0 // pred_check_branch
    %20 = sbr.rel (0) target = $region13
  $region12: #{_single_forward.1} parent=0 // pred_region
    _
  $region13: #{_single_forward.1} parent=0 // pred_fallthru
    _
  // Predicated region
  $region14: #{_single_forward.1} parent=0 // pred_check
    _
  $region15: #{_single_forward.1} parent=0 // pred_check_branch
    %22 = sbr.rel (0) target = $region17
  $region16: #{_single_forward.1} parent=0 // pred_region
    _
  $region17: #{_single_forward.1} parent=0 // pred_fallthru
    _
  // Predicated region
  $region18: #{_single_forward.1} parent=0 // pred_check
    _
  $region19: #{_single_forward.1} parent=0 // pred_check_branch
    %24 = sbr.rel (0) target = $region21
  $region20: #{_single_forward.1} parent=0 // pred_region
    _
  $region21: #{_single_forward.1} parent=0 // pred_fallthru
    _
  // Predicated region
  $region22: #{_single_forward.1} parent=0 // pred_check
    _
  $region23: #{_single_forward.1} parent=0 // pred_check_branch
    %26 = sbr.rel (0) target = $region25
  $region24: #{_single_forward.1} parent=0 // pred_region
    _
  $region25: #{_single_forward.1} parent=0 // pred_fallthru
    _
  // Predicated region
  $region26: #{_single_forward.1} parent=0 // pred_check
    _
  $region27: #{_single_forward.1} parent=0 // pred_check_branch
    %28 = sbr.rel (0) target = $region29
  $region28: #{_single_forward.1} parent=0 // pred_region
    _
  $region29: #{_single_forward.1} parent=0 // pred_fallthru
    _
  %v29 = vld [vmem:[%s0] sm:$0xff]
  %v30 = vld [vmem:[%s0 + $0x8] sm:$0xff]
  %v31 = vld [vmem:[%s0 + $0x10] sm:$0xff]
  %v32 = vld [vmem:[%s0 + $0x18] sm:$0xff]
  %v33 = vld [vmem:[%s0 + $0x20] sm:$0xff]
  %v34 = vld [vmem:[%s0 + $0x28] sm:$0xff]
  %v35 = vld [vmem:[%s0 + $0x30] sm:$0xff]
  %v36 = vld [vmem:[%s0 + $0x38] sm:$0xff]
  %v37 = vld [vmem:[%s2] sm:$0xff]
  %v38 = vld [vmem:[%s2 + $0x8] sm:$0xff]
  %v39 = vld [vmem:[%s2 + $0x10] sm:$0xff]
  %v40 = vld [vmem:[%s2 + $0x18] sm:$0xff]
  %v41 = vld [vmem:[%s3] sm:$0x1]
  %v43 = vlaneseq
  %v44 = vshrl.u32 %v43, 7
  %v45 = vsub.s32 0, %v44
  %v46 = vrot.slane %v41, %v45
  %vm48 = vcmask 261120
  %v50 = vsel %vm48, %v29, 0
  %v53 = vsel %vm48, %v30, 0
  %v56 = vsel %vm48, %v31, 0
  %v59 = vsel %vm48, %v32, 0
  %v62 = vsel %vm48, %v33, 0
  %v65 = vsel %vm48, %v34, 0
  %v68 = vsel %vm48, %v35, 0
  %v71 = vsel %vm48, %v36, 0
  %73 = vmatprep.subr.mxu0 0.0
  %74 = vmatpush1.msra.mxu0 %v37
  %75 = vmatprep.subr.mxu0 0.0
  %76 = vmatpush1.msra.mxu0 %v38
  %77 = vmatprep.subr.mxu0 0.0
  %78 = vmatpush1.msra.mxu0 %v39
  %79 = vmatprep.subr.mxu0 0.0
  %80 = vmatpush1.msra.mxu0 %v40
  %81 = vmatprep.subr.mxu0 0.0
  %82 = vmatpush1.msra.mxu0 0.0
  %83 = vmatprep.subr.mxu0 0.0
  %84 = vmatpush1.msra.mxu0 0.0
  %85 = vmatprep.subr.mxu0 0.0
  %86 = vmatpush1.msra.mxu0 0.0
  %87 = vmatprep.subr.mxu0 0.0
  %88 = vmatpush1.msra.mxu0 0.0
  %89 = vmatprep.subr.mxu0 0.0
  %90 = vmatpush1.msra.mxu0 0.0
  %91 = vmatprep.subr.mxu0 0.0
  %92 = vmatpush1.msra.mxu0 0.0
  %93 = vmatprep.subr.mxu0 0.0
  %94 = vmatpush1.msra.mxu0 0.0
  %95 = vmatprep.subr.mxu0 0.0
  %96 = vmatpush1.msra.mxu0 0.0
  %97 = vmatprep.subr.mxu0 0.0
  %98 = vmatpush1.msra.mxu0 0.0
  %99 = vmatprep.subr.mxu0 0.0
  %100 = vmatpush1.msra.mxu0 0.0
  %101 = vmatprep.subr.mxu0 0.0
  %102 = vmatpush1.msra.mxu0 0.0
  %103 = vmatprep.subr.mxu0 0.0
  %104 = vmatpush1.msra.mxu0 0.0
  %105 = vmatprep.subr.mxu0 0.0
  %106 = vmatpush1.msra.mxu0 0.0
  %107 = vmatprep.subr.mxu0 0.0
  %108 = vmatpush1.msra.mxu0 0.0
  %109 = vmatprep.subr.mxu0 0.0
  %110 = vmatpush1.msra.mxu0 0.0
  %111 = vmatprep.subr.mxu0 0.0
  %112 = vmatpush1.msra.mxu0 0.0
  %113 = vmatprep.subr.mxu0 0.0
  %114 = vmatpush1.msra.mxu0 0.0
  %115 = vmatprep.subr.mxu0 0.0
  %116 = vmatpush1.msra.mxu0 0.0
  %117 = vmatprep.subr.mxu0 0.0
  %118 = vmatpush1.msra.mxu0 0.0
  %119 = vmatprep.subr.mxu0 0.0
  %120 = vmatpush1.msra.mxu0 0.0
  %121 = vmatprep.subr.mxu0 0.0
  %122 = vmatpush1.msra.mxu0 0.0
  %123 = vmatprep.subr.mxu0 0.0
  %124 = vmatpush1.msra.mxu0 0.0
  %125 = vmatprep.subr.mxu0 0.0
  %126 = vmatpush1.msra.mxu0 0.0
  %127 = vmatprep.subr.mxu0 0.0
  %128 = vmatpush1.msra.mxu0 0.0
  %129 = vmatprep.subr.mxu0 0.0
  %130 = vmatpush1.msra.mxu0 0.0
  %131 = vmatprep.subr.mxu0 0.0
  %132 = vmatpush1.msra.mxu0 0.0
  %133 = vmatprep.subr.mxu0 0.0
  %134 = vmatpush1.msra.mxu0 0.0
  %135 = vmatprep.subr.mxu0 0.0
  %136 = vmatpush1.msra.mxu0 0.0
  %137 = vmatprep.mubr.f32.mxu0 0.0
  %138 = vmatmul.mubr.f32.gmra.mrb[0].mxu0 %v50
  %v139 = vpop.f32.mrb[0].mxu0
  %v140 = vadd.f32 %v46, %v139
  %v141 = vpop.f32.mrb[0].mxu0
  %142 = vmatprep.mubr.f32.mxu0 0.0
  %143 = vmatmul.mubr.f32.gmra.mrb[0].mxu0 %v53
  %v144 = vpop.f32.mrb[0].mxu0
  %v145 = vadd.f32 %v46, %v144
  %v146 = vpop.f32.mrb[0].mxu0
  %147 = vmatprep.mubr.f32.mxu0 0.0
  %148 = vmatmul.mubr.f32.gmra.mrb[0].mxu0 %v56
  %v149 = vpop.f32.mrb[0].mxu0
  %v150 = vadd.f32 %v46, %v149
  %v151 = vpop.f32.mrb[0].mxu0
  %152 = vmatprep.mubr.f32.mxu0 0.0
  %153 = vmatmul.mubr.f32.gmra.mrb[0].mxu0 %v59
  %v154 = vpop.f32.mrb[0].mxu0
  %v155 = vadd.f32 %v46, %v154
  %v156 = vpop.f32.mrb[0].mxu0
  %157 = vmatprep.mubr.f32.mxu0 0.0
  %158 = vmatmul.mubr.f32.gmra.mrb[0].mxu0 %v62
  %v159 = vpop.f32.mrb[0].mxu0
  %v160 = vadd.f32 %v46, %v159
  %v161 = vpop.f32.mrb[0].mxu0
  %162 = vmatprep.mubr.f32.mxu0 0.0
  %163 = vmatmul.mubr.f32.gmra.mrb[0].mxu0 %v65
  %v164 = vpop.f32.mrb[0].mxu0
  %v165 = vadd.f32 %v46, %v164
  %v166 = vpop.f32.mrb[0].mxu0
  %167 = vmatprep.mubr.f32.mxu0 0.0
  %168 = vmatmul.mubr.f32.gmra.mrb[0].mxu0 %v68
  %v169 = vpop.f32.mrb[0].mxu0
  %v170 = vadd.f32 %v46, %v169
  %v171 = vpop.f32.mrb[0].mxu0
  %172 = vmatprep.mubr.f32.mxu0 0.0
  %173 = vmatmul.mubr.f32.gmra.mrb[0].mxu0 %v71
  %v174 = vpop.f32.mrb[0].mxu0
  %v175 = vadd.f32 %v46, %v174
  %v176 = vpop.f32.mrb[0].mxu0
  %177 = vdwg.mxu0
  %v178 = vtanh.pop %v140
  %v179 = vtanh.pop %v145
  %v180 = vtanh.pop %v150
  %v181 = vtanh.pop %v155
  %v182 = vtanh.pop %v160
  %v183 = vtanh.pop %v165
  %v184 = vtanh.pop %v170
  %v185 = vtanh.pop %v175
  %186 = vst.msk [vmem:[%s8] sm:$0xff] %vm48, %v178
  %187 = vst.msk [vmem:[%s8 + $0x8] sm:$0xff] %vm48, %v179
  %188 = vst.msk [vmem:[%s8 + $0x10] sm:$0xff] %vm48, %v180
  %189 = vst.msk [vmem:[%s8 + $0x18] sm:$0xff] %vm48, %v181
  %190 = vst.msk [vmem:[%s8 + $0x20] sm:$0xff] %vm48, %v182
  %191 = vst.msk [vmem:[%s8 + $0x28] sm:$0xff] %vm48, %v183
  %192 = vst.msk [vmem:[%s8 + $0x30] sm:$0xff] %vm48, %v184
  %193 = vst.msk [vmem:[%s8 + $0x38] sm:$0xff] %vm48, %v185
  %v194 = vld [vmem:[%s1] sm:$0xff]
  %v195 = vld [vmem:[%s1 + $0x8] sm:$0xff]
  %v196 = vld [vmem:[%s1 + $0x10] sm:$0x3]
  %v197 = vld [vmem:[%s1 + $0x18] sm:$0xff]
  %v198 = vld [vmem:[%s1 + $0x20] sm:$0xff]
  %v199 = vld [vmem:[%s1 + $0x28] sm:$0x3]
  %v200 = vld [vmem:[%s1 + $0x30] sm:$0xff]
  %v201 = vld [vmem:[%s1 + $0x38] sm:$0xff]
  %v202 = vld [vmem:[%s1 + $0x40] sm:$0x3]
  %v203 = vld [vmem:[%s1 + $0x48] sm:$0xff]
  %v204 = vld [vmem:[%s1 + $0x50] sm:$0xff]
  %v205 = vld [vmem:[%s1 + $0x58] sm:$0x3]
  %v206 = vld [vmem:[%s1 + $0x60] sm:$0xff]
  %v207 = vld [vmem:[%s1 + $0x68] sm:$0xff]
  %v208 = vld [vmem:[%s1 + $0x70] sm:$0x3]
  %v209 = vld [vmem:[%s1 + $0x78] sm:$0xff]
  %v210 = vld [vmem:[%s1 + $0x80] sm:$0xff]
  %v211 = vld [vmem:[%s1 + $0x88] sm:$0x3]
  %v212 = vld [vmem:[%s1 + $0x90] sm:$0xff]
  %v213 = vld [vmem:[%s1 + $0x98] sm:$0xff]
  %v214 = vld [vmem:[%s1 + $0xa0] sm:$0x3]
  %v215 = vld [vmem:[%s1 + $0xa8] sm:$0xff]
  %v216 = vld [vmem:[%s1 + $0xb0] sm:$0xff]
  %v217 = vld [vmem:[%s1 + $0xb8] sm:$0x3]
  %v218 = vld [vmem:[%s4] sm:$0xff]
  %v219 = vld [vmem:[%s4 + $0x8] sm:$0xff]
  %v220 = vld [vmem:[%s4 + $0x10] sm:$0xff]
  %v221 = vld [vmem:[%s4 + $0x18] sm:$0xff]
  %vm246 = vcmask 1046528
  %v247 = vrot.slane %v194, 1
  %v248 = vrot.slane %v195, 1
  %v249 = vsel %vm246, %v247, %v248
  %v250 = vrot.slane %v196, 1
  %v251 = vsel %vm246, %v248, %v250
  %v252 = vrot.slane %v197, 1
  %v253 = vrot.slane %v198, 1
  %v254 = vsel %vm246, %v252, %v253
  %v255 = vrot.slane %v199, 1
  %v256 = vsel %vm246, %v253, %v255
  %v257 = vrot.slane %v200, 1
  %v258 = vrot.slane %v201, 1
  %v259 = vsel %vm246, %v257, %v258
  %v260 = vrot.slane %v202, 1
  %v261 = vsel %vm246, %v258, %v260
  %v262 = vrot.slane %v203, 1
  %v263 = vrot.slane %v204, 1
  %v264 = vsel %vm246, %v262, %v263
  %v265 = vrot.slane %v205, 1
  %v266 = vsel %vm246, %v263, %v265
  %v267 = vrot.slane %v206, 1
  %v268 = vrot.slane %v207, 1
  %v269 = vsel %vm246, %v267, %v268
  %v270 = vrot.slane %v208, 1
  %v271 = vsel %vm246, %v268, %v270
  %v272 = vrot.slane %v209, 1
  %v273 = vrot.slane %v210, 1
  %v274 = vsel %vm246, %v272, %v273
  %v275 = vrot.slane %v211, 1
  %v276 = vsel %vm246, %v273, %v275
  %v277 = vrot.slane %v212, 1
  %v278 = vrot.slane %v213, 1
  %v279 = vsel %vm246, %v277, %v278
  %v280 = vrot.slane %v214, 1
  %v281 = vsel %vm246, %v278, %v280
  %v282 = vrot.slane %v215, 1
  %v283 = vrot.slane %v216, 1
  %v284 = vsel %vm246, %v282, %v283
  %v285 = vrot.slane %v217, 1
  %v286 = vsel %vm246, %v283, %v285
  %v287 = vld [vmem:[%s4 + $0x20] sm:$0xff]
  %v288 = vld [vmem:[%s4 + $0x28] sm:$0xff]
  %v289 = vld [vmem:[%s4 + $0x30] sm:$0xff]
  %v290 = vld [vmem:[%s4 + $0x38] sm:$0xff]
  %v291 = vsel %vm48, %v249, 0
  %v293 = vsel %vm48, %v251, 0
  %v295 = vsel %vm48, %v254, 0
  %v297 = vsel %vm48, %v256, 0
  %v299 = vsel %vm48, %v259, 0
  %v301 = vsel %vm48, %v261, 0
  %v303 = vsel %vm48, %v264, 0
  %v305 = vsel %vm48, %v266, 0
  %v307 = vsel %vm48, %v269, 0
  %v309 = vsel %vm48, %v271, 0
  %v311 = vsel %vm48, %v274, 0
  %v313 = vsel %vm48, %v276, 0
  %v315 = vsel %vm48, %v279, 0
  %v317 = vsel %vm48, %v281, 0
  %v319 = vsel %vm48, %v284, 0
  %v321 = vsel %vm48, %v286, 0
  %323 = vmatprep.subr.mxu0 0.0
  %324 = vmatpush1.msra.mxu0 %v287
  %325 = vmatprep.subr.mxu0 0.0
  %326 = vmatpush1.msra.mxu0 %v288
  %327 = vmatprep.subr.mxu0 0.0
  %328 = vmatpush1.msra.mxu0 %v289
  %329 = vmatprep.subr.mxu0 0.0
  %330 = vmatpush1.msra.mxu0 %v290
  %331 = vmatprep.subr.mxu0 0.0
  %332 = vmatpush1.msra.mxu0 0.0
  %333 = vmatprep.subr.mxu0 0.0
  %334 = vmatpush1.msra.mxu0 0.0
  %335 = vmatprep.subr.mxu0 0.0
  %336 = vmatpush1.msra.mxu0 0.0
  %337 = vmatprep.subr.mxu0 0.0
  %338 = vmatpush1.msra.mxu0 0.0
  %339 = vmatprep.subr.mxu0 0.0
  %340 = vmatpush1.msra.mxu0 0.0
  %341 = vmatprep.subr.mxu0 0.0
  %342 = vmatpush1.msra.mxu0 0.0
  %343 = vmatprep.subr.mxu0 0.0
  %344 = vmatpush1.msra.mxu0 0.0
  %345 = vmatprep.subr.mxu0 0.0
  %346 = vmatpush1.msra.mxu0 0.0
  %347 = vmatprep.subr.mxu0 0.0
  %348 = vmatpush1.msra.mxu0 0.0
  %349 = vmatprep.subr.mxu0 0.0
  %350 = vmatpush1.msra.mxu0 0.0
  %351 = vmatprep.subr.mxu0 0.0
  %352 = vmatpush1.msra.mxu0 0.0
  %353 = vmatprep.subr.mxu0 0.0
  %354 = vmatpush1.msra.mxu0 0.0
  %355 = vmatprep.subr.mxu0 0.0
  %356 = vmatpush1.msra.mxu0 0.0
  %357 = vmatprep.subr.mxu0 0.0
  %358 = vmatpush1.msra.mxu0 0.0
  %359 = vmatprep.subr.mxu0 0.0
  %360 = vmatpush1.msra.mxu0 0.0
  %361 = vmatprep.subr.mxu0 0.0
  %362 = vmatpush1.msra.mxu0 0.0
  %363 = vmatprep.subr.mxu0 0.0
  %364 = vmatpush1.msra.mxu0 0.0
  %365 = vmatprep.subr.mxu0 0.0
  %366 = vmatpush1.msra.mxu0 0.0
  %367 = vmatprep.subr.mxu0 0.0
  %368 = vmatpush1.msra.mxu0 0.0
  %369 = vmatprep.subr.mxu0 0.0
  %370 = vmatpush1.msra.mxu0 0.0
  %371 = vmatprep.subr.mxu0 0.0
  %372 = vmatpush1.msra.mxu0 0.0
  %373 = vmatprep.subr.mxu0 0.0
  %374 = vmatpush1.msra.mxu0 0.0
  %375 = vmatprep.subr.mxu0 0.0
  %376 = vmatpush1.msra.mxu0 0.0
  %377 = vmatprep.subr.mxu0 0.0
  %378 = vmatpush1.msra.mxu0 0.0
  %379 = vmatprep.subr.mxu0 0.0
  %380 = vmatpush1.msra.mxu0 0.0
  %381 = vmatprep.subr.mxu0 0.0
  %382 = vmatpush1.msra.mxu0 0.0
  %383 = vmatprep.subr.mxu0 0.0
  %384 = vmatpush1.msra.mxu0 0.0
  %385 = vmatprep.subr.mxu0 0.0
  %386 = vmatpush1.msra.mxu0 0.0
  %387 = vmatprep.mubr.f32.mxu0 0.0
  %388 = vmatmul.mubr.f32.gmra.mrb[0].mxu0 %v291
  %v389 = vpop.f32.mrb[0].mxu0
  %v390 = vadd.f32 0.0, %v389
  %v391 = vpop.f32.mrb[0].mxu0
  %392 = vmatprep.mubr.f32.mxu0 0.0
  %393 = vmatmul.mubr.f32.gmra.mrb[0].mxu0 %v293
  %v394 = vpop.f32.mrb[0].mxu0
  %v395 = vadd.f32 0.0, %v394
  %v396 = vpop.f32.mrb[0].mxu0
  %397 = vmatprep.mubr.f32.mxu0 0.0
  %398 = vmatmul.mubr.f32.gmra.mrb[0].mxu0 %v295
  %v399 = vpop.f32.mrb[0].mxu0
  %v400 = vadd.f32 0.0, %v399
  %v401 = vpop.f32.mrb[0].mxu0
  %402 = vmatprep.mubr.f32.mxu0 0.0
  %403 = vmatmul.mubr.f32.gmra.mrb[0].mxu0 %v297
  %v404 = vpop.f32.mrb[0].mxu0
  %v405 = vadd.f32 0.0, %v404
  %v406 = vpop.f32.mrb[0].mxu0
  %407 = vmatprep.mubr.f32.mxu0 0.0
  %408 = vmatmul.mubr.f32.gmra.mrb[0].mxu0 %v299
  %v409 = vpop.f32.mrb[0].mxu0
  %v410 = vadd.f32 0.0, %v409
  %v411 = vpop.f32.mrb[0].mxu0
  %412 = vmatprep.mubr.f32.mxu0 0.0
  %413 = vmatmul.mubr.f32.gmra.mrb[0].mxu0 %v301
  %v414 = vpop.f32.mrb[0].mxu0
  %v415 = vadd.f32 0.0, %v414
  %v416 = vpop.f32.mrb[0].mxu0
  %417 = vmatprep.mubr.f32.mxu0 0.0
  %418 = vmatmul.mubr.f32.gmra.mrb[0].mxu0 %v303
  %v419 = vpop.f32.mrb[0].mxu0
  %v420 = vadd.f32 0.0, %v419
  %v421 = vpop.f32.mrb[0].mxu0
  %422 = vmatprep.mubr.f32.mxu0 0.0
  %423 = vmatmul.mubr.f32.gmra.mrb[0].mxu0 %v305
  %v424 = vpop.f32.mrb[0].mxu0
  %v425 = vadd.f32 0.0, %v424
  %v426 = vpop.f32.mrb[0].mxu0
  %427 = vmatprep.mubr.f32.mxu0 0.0
  %428 = vmatmul.mubr.f32.gmra.mrb[0].mxu0 %v307
  %v429 = vpop.f32.mrb[0].mxu0
  %v430 = vadd.f32 0.0, %v429
  %v431 = vpop.f32.mrb[0].mxu0
  %432 = vmatprep.mubr.f32.mxu0 0.0
  %433 = vmatmul.mubr.f32.gmra.mrb[0].mxu0 %v309
  %v434 = vpop.f32.mrb[0].mxu0
  %v435 = vadd.f32 0.0, %v434
  %v436 = vpop.f32.mrb[0].mxu0
  %437 = vmatprep.mubr.f32.mxu0 0.0
  %438 = vmatmul.mubr.f32.gmra.mrb[0].mxu0 %v311
  %v439 = vpop.f32.mrb[0].mxu0
  %v440 = vadd.f32 0.0, %v439
  %v441 = vpop.f32.mrb[0].mxu0
  %442 = vmatprep.mubr.f32.mxu0 0.0
  %443 = vmatmul.mubr.f32.gmra.mrb[0].mxu0 %v313
  %v444 = vpop.f32.mrb[0].mxu0
  %v445 = vadd.f32 0.0, %v444
  %v446 = vpop.f32.mrb[0].mxu0
  %447 = vmatprep.mubr.f32.mxu0 0.0
  %448 = vmatmul.mubr.f32.gmra.mrb[0].mxu0 %v315
  %v449 = vpop.f32.mrb[0].mxu0
  %v450 = vadd.f32 0.0, %v449
  %v451 = vpop.f32.mrb[0].mxu0
  %452 = vmatprep.mubr.f32.mxu0 0.0
  %453 = vmatmul.mubr.f32.gmra.mrb[0].mxu0 %v317
  %v454 = vpop.f32.mrb[0].mxu0
  %v455 = vadd.f32 0.0, %v454
  %v456 = vpop.f32.mrb[0].mxu0
  %457 = vmatprep.mubr.f32.mxu0 0.0
  %458 = vmatmul.mubr.f32.gmra.mrb[0].mxu0 %v319
  %v459 = vpop.f32.mrb[0].mxu0
  %v460 = vadd.f32 0.0, %v459
  %v461 = vpop.f32.mrb[0].mxu0
  %462 = vmatprep.mubr.f32.mxu0 0.0
  %463 = vmatmul.mubr.f32.gmra.mrb[0].mxu0 %v321
  %v464 = vpop.f32.mrb[0].mxu0
  %v465 = vadd.f32 0.0, %v464
  %v466 = vpop.f32.mrb[0].mxu0
  %467 = vdwg.mxu0
  %v468 = vsel %vm48, %v194, 0
  %v470 = vsel %vm48, %v195, 0
  %v472 = vsel %vm48, %v197, 0
  %v474 = vsel %vm48, %v198, 0
  %v476 = vsel %vm48, %v200, 0
  %v478 = vsel %vm48, %v201, 0
  %v480 = vsel %vm48, %v203, 0
  %v482 = vsel %vm48, %v204, 0
  %v484 = vsel %vm48, %v206, 0
  %v486 = vsel %vm48, %v207, 0
  %v488 = vsel %vm48, %v209, 0
  %v490 = vsel %vm48, %v210, 0
  %v492 = vsel %vm48, %v212, 0
  %v494 = vsel %vm48, %v213, 0
  %v496 = vsel %vm48, %v215, 0
  %v498 = vsel %vm48, %v216, 0
  %500 = vmatprep.subr.mxu0 0.0
  %501 = vmatpush1.msra.mxu0 %v218
  %502 = vmatprep.subr.mxu0 0.0
  %503 = vmatpush1.msra.mxu0 %v219
  %504 = vmatprep.subr.mxu0 0.0
  %505 = vmatpush1.msra.mxu0 %v220
  %506 = vmatprep.subr.mxu0 0.0
  %507 = vmatpush1.msra.mxu0 %v221
  %508 = vmatprep.subr.mxu0 0.0
  %509 = vmatpush1.msra.mxu0 0.0
  %510 = vmatprep.subr.mxu0 0.0
  %511 = vmatpush1.msra.mxu0 0.0
  %512 = vmatprep.subr.mxu0 0.0
  %513 = vmatpush1.msra.mxu0 0.0
  %514 = vmatprep.subr.mxu0 0.0
  %515 = vmatpush1.msra.mxu0 0.0
  %516 = vmatprep.subr.mxu0 0.0
  %517 = vmatpush1.msra.mxu0 0.0
  %518 = vmatprep.subr.mxu0 0.0
  %519 = vmatpush1.msra.mxu0 0.0
  %520 = vmatprep.subr.mxu0 0.0
  %521 = vmatpush1.msra.mxu0 0.0
  %522 = vmatprep.subr.mxu0 0.0
  %523 = vmatpush1.msra.mxu0 0.0
  %524 = vmatprep.subr.mxu0 0.0
  %525 = vmatpush1.msra.mxu0 0.0
  %526 = vmatprep.subr.mxu0 0.0
  %527 = vmatpush1.msra.mxu0 0.0
  %528 = vmatprep.subr.mxu0 0.0
  %529 = vmatpush1.msra.mxu0 0.0
  %530 = vmatprep.subr.mxu0 0.0
  %531 = vmatpush1.msra.mxu0 0.0
  %532 = vmatprep.subr.mxu0 0.0
  %533 = vmatpush1.msra.mxu0 0.0
  %534 = vmatprep.subr.mxu0 0.0
  %535 = vmatpush1.msra.mxu0 0.0
  %536 = vmatprep.subr.mxu0 0.0
  %537 = vmatpush1.msra.mxu0 0.0
  %538 = vmatprep.subr.mxu0 0.0
  %539 = vmatpush1.msra.mxu0 0.0
  %540 = vmatprep.subr.mxu0 0.0
  %541 = vmatpush1.msra.mxu0 0.0
  %542 = vmatprep.subr.mxu0 0.0
  %543 = vmatpush1.msra.mxu0 0.0
  %544 = vmatprep.subr.mxu0 0.0
  %545 = vmatpush1.msra.mxu0 0.0
  %546 = vmatprep.subr.mxu0 0.0
  %547 = vmatpush1.msra.mxu0 0.0
  %548 = vmatprep.subr.mxu0 0.0
  %549 = vmatpush1.msra.mxu0 0.0
  %550 = vmatprep.subr.mxu0 0.0
  %551 = vmatpush1.msra.mxu0 0.0
  %552 = vmatprep.subr.mxu0 0.0
  %553 = vmatpush1.msra.mxu0 0.0
  %554 = vmatprep.subr.mxu0 0.0
  %555 = vmatpush1.msra.mxu0 0.0
  %556 = vmatprep.subr.mxu0 0.0
  %557 = vmatpush1.msra.mxu0 0.0
  %558 = vmatprep.subr.mxu0 0.0
  %559 = vmatpush1.msra.mxu0 0.0
  %560 = vmatprep.subr.mxu0 0.0
  %561 = vmatpush1.msra.mxu0 0.0
  %562 = vmatprep.subr.mxu0 0.0
  %563 = vmatpush1.msra.mxu0 0.0
  %564 = vmatprep.mubr.f32.mxu0 0.0
  %565 = vmatmul.mubr.f32.gmra.mrb[0].mxu0 %v468
  %v566 = vpop.f32.mrb[0].mxu0
  %v567 = vadd.f32 %v390, %v566
  %v568 = vpop.f32.mrb[0].mxu0
  %569 = vmatprep.mubr.f32.mxu0 0.0
  %570 = vmatmul.mubr.f32.gmra.mrb[0].mxu0 %v470
  %v571 = vpop.f32.mrb[0].mxu0
  %v572 = vadd.f32 %v395, %v571
  %v573 = vpop.f32.mrb[0].mxu0
  %574 = vmatprep.mubr.f32.mxu0 0.0
  %575 = vmatmul.mubr.f32.gmra.mrb[0].mxu0 %v472
  %v576 = vpop.f32.mrb[0].mxu0
  %v577 = vadd.f32 %v400, %v576
  %v578 = vpop.f32.mrb[0].mxu0
  %579 = vmatprep.mubr.f32.mxu0 0.0
  %580 = vmatmul.mubr.f32.gmra.mrb[0].mxu0 %v474
  %v581 = vpop.f32.mrb[0].mxu0
  %v582 = vadd.f32 %v405, %v581
  %v583 = vpop.f32.mrb[0].mxu0
  %584 = vmatprep.mubr.f32.mxu0 0.0
  %585 = vmatmul.mubr.f32.gmra.mrb[0].mxu0 %v476
  %v586 = vpop.f32.mrb[0].mxu0
  %v587 = vadd.f32 %v410, %v586
  %v588 = vpop.f32.mrb[0].mxu0
  %589 = vmatprep.mubr.f32.mxu0 0.0
  %590 = vmatmul.mubr.f32.gmra.mrb[0].mxu0 %v478
  %v591 = vpop.f32.mrb[0].mxu0
  %v592 = vadd.f32 %v415, %v591
  %v593 = vpop.f32.mrb[0].mxu0
  %594 = vmatprep.mubr.f32.mxu0 0.0
  %595 = vmatmul.mubr.f32.gmra.mrb[0].mxu0 %v480
  %v596 = vpop.f32.mrb[0].mxu0
  %v597 = vadd.f32 %v420, %v596
  %v598 = vpop.f32.mrb[0].mxu0
  %599 = vmatprep.mubr.f32.mxu0 0.0
  %600 = vmatmul.mubr.f32.gmra.mrb[0].mxu0 %v482
  %v601 = vpop.f32.mrb[0].mxu0
  %v602 = vadd.f32 %v425, %v601
  %v603 = vpop.f32.mrb[0].mxu0
  %604 = vmatprep.mubr.f32.mxu0 0.0
  %605 = vmatmul.mubr.f32.gmra.mrb[0].mxu0 %v484
  %v606 = vpop.f32.mrb[0].mxu0
  %v607 = vadd.f32 %v430, %v606
  %v608 = vpop.f32.mrb[0].mxu0
  %609 = vmatprep.mubr.f32.mxu0 0.0
  %610 = vmatmul.mubr.f32.gmra.mrb[0].mxu0 %v486
  %v611 = vpop.f32.mrb[0].mxu0
  %v612 = vadd.f32 %v435, %v611
  %v613 = vpop.f32.mrb[0].mxu0
  %614 = vmatprep.mubr.f32.mxu0 0.0
  %615 = vmatmul.mubr.f32.gmra.mrb[0].mxu0 %v488
  %v616 = vpop.f32.mrb[0].mxu0
  %v617 = vadd.f32 %v440, %v616
  %v618 = vpop.f32.mrb[0].mxu0
  %619 = vmatprep.mubr.f32.mxu0 0.0
  %620 = vmatmul.mubr.f32.gmra.mrb[0].mxu0 %v490
  %v621 = vpop.f32.mrb[0].mxu0
  %v622 = vadd.f32 %v445, %v621
  %v623 = vpop.f32.mrb[0].mxu0
  %624 = vmatprep.mubr.f32.mxu0 0.0
  %625 = vmatmul.mubr.f32.gmra.mrb[0].mxu0 %v492
  %v626 = vpop.f32.mrb[0].mxu0
  %v627 = vadd.f32 %v450, %v626
  %v628 = vpop.f32.mrb[0].mxu0
  %629 = vmatprep.mubr.f32.mxu0 0.0
  %630 = vmatmul.mubr.f32.gmra.mrb[0].mxu0 %v494
  %v631 = vpop.f32.mrb[0].mxu0
  %v632 = vadd.f32 %v455, %v631
  %v633 = vpop.f32.mrb[0].mxu0
  %634 = vmatprep.mubr.f32.mxu0 0.0
  %635 = vmatmul.mubr.f32.gmra.mrb[0].mxu0 %v496
  %v636 = vpop.f32.mrb[0].mxu0
  %v637 = vadd.f32 %v460, %v636
  %v638 = vpop.f32.mrb[0].mxu0
  %639 = vmatprep.mubr.f32.mxu0 0.0
  %640 = vmatmul.mubr.f32.gmra.mrb[0].mxu0 %v498
  %v641 = vpop.f32.mrb[0].mxu0
  %v642 = vadd.f32 %v465, %v641
  %v643 = vpop.f32.mrb[0].mxu0
  %644 = vdwg.mxu0
  %vm645 = vcmask 1045504
  %v646 = vrot.slane %v194, 2
  %v647 = vrot.slane %v195, 2
  %v648 = vsel %vm645, %v646, %v647
  %v649 = vrot.slane %v196, 2
  %v650 = vsel %vm645, %v647, %v649
  %v651 = vrot.slane %v197, 2
  %v652 = vrot.slane %v198, 2
  %v653 = vsel %vm645, %v651, %v652
  %v654 = vrot.slane %v199, 2
  %v655 = vsel %vm645, %v652, %v654
  %v656 = vrot.slane %v200, 2
  %v657 = vrot.slane %v201, 2
  %v658 = vsel %vm645, %v656, %v657
  %v659 = vrot.slane %v202, 2
  %v660 = vsel %vm645, %v657, %v659
  %v661 = vrot.slane %v203, 2
  %v662 = vrot.slane %v204, 2
  %v663 = vsel %vm645, %v661, %v662
  %v664 = vrot.slane %v205, 2
  %v665 = vsel %vm645, %v662, %v664
  %v666 = vrot.slane %v206, 2
  %v667 = vrot.slane %v207, 2
  %v668 = vsel %vm645, %v666, %v667
  %v669 = vrot.slane %v208, 2
  %v670 = vsel %vm645, %v667, %v669
  %v671 = vrot.slane %v209, 2
  %v672 = vrot.slane %v210, 2
  %v673 = vsel %vm645, %v671, %v672
  %v674 = vrot.slane %v211, 2
  %v675 = vsel %vm645, %v672, %v674
  %v676 = vrot.slane %v212, 2
  %v677 = vrot.slane %v213, 2
  %v678 = vsel %vm645, %v676, %v677
  %v679 = vrot.slane %v214, 2
  %v680 = vsel %vm645, %v677, %v679
  %v681 = vrot.slane %v215, 2
  %v682 = vrot.slane %v216, 2
  %v683 = vsel %vm645, %v681, %v682
  %v684 = vrot.slane %v217, 2
  %v685 = vsel %vm645, %v682, %v684
  %v686 = vld [vmem:[%s4 + $0x40] sm:$0xff]
  %v687 = vld [vmem:[%s4 + $0x48] sm:$0xff]
  %v688 = vld [vmem:[%s4 + $0x50] sm:$0xff]
  %v689 = vld [vmem:[%s4 + $0x58] sm:$0xff]
  %v690 = vsel %vm48, %v648, 0
  %v692 = vsel %vm48, %v650, 0
  %v694 = vsel %vm48, %v653, 0
  %v696 = vsel %vm48, %v655, 0
  %v698 = vsel %vm48, %v658, 0
  %v700 = vsel %vm48, %v660, 0
  %v702 = vsel %vm48, %v663, 0
  %v704 = vsel %vm48, %v665, 0
  %v706 = vsel %vm48, %v668, 0
  %v708 = vsel %vm48, %v670, 0
  %v710 = vsel %vm48, %v673, 0
  %v712 = vsel %vm48, %v675, 0
  %v714 = vsel %vm48, %v678, 0
  %v716 = vsel %vm48, %v680, 0
  %v718 = vsel %vm48, %v683, 0
  %v720 = vsel %vm48, %v685, 0
  %722 = vmatprep.subr.mxu0 0.0
  %723 = vmatpush1.msra.mxu0 %v686
  %724 = vmatprep.subr.mxu0 0.0
  %725 = vmatpush1.msra.mxu0 %v687
  %726 = vmatprep.subr.mxu0 0.0
  %727 = vmatpush1.msra.mxu0 %v688
  %728 = vmatprep.subr.mxu0 0.0
  %729 = vmatpush1.msra.mxu0 %v689
  %730 = vmatprep.subr.mxu0 0.0
  %731 = vmatpush1.msra.mxu0 0.0
  %732 = vmatprep.subr.mxu0 0.0
  %733 = vmatpush1.msra.mxu0 0.0
  %734 = vmatprep.subr.mxu0 0.0
  %735 = vmatpush1.msra.mxu0 0.0
  %736 = vmatprep.subr.mxu0 0.0
  %737 = vmatpush1.msra.mxu0 0.0
  %738 = vmatprep.subr.mxu0 0.0
  %739 = vmatpush1.msra.mxu0 0.0
  %740 = vmatprep.subr.mxu0 0.0
  %741 = vmatpush1.msra.mxu0 0.0
  %742 = vmatprep.subr.mxu0 0.0
  %743 = vmatpush1.msra.mxu0 0.0
  %744 = vmatprep.subr.mxu0 0.0
  %745 = vmatpush1.msra.mxu0 0.0
  %746 = vmatprep.subr.mxu0 0.0
  %747 = vmatpush1.msra.mxu0 0.0
  %748 = vmatprep.subr.mxu0 0.0
  %749 = vmatpush1.msra.mxu0 0.0
  %750 = vmatprep.subr.mxu0 0.0
  %751 = vmatpush1.msra.mxu0 0.0
  %752 = vmatprep.subr.mxu0 0.0
  %753 = vmatpush1.msra.mxu0 0.0
  %754 = vmatprep.subr.mxu0 0.0
  %755 = vmatpush1.msra.mxu0 0.0
  %756 = vmatprep.subr.mxu0 0.0
  %757 = vmatpush1.msra.mxu0 0.0
  %758 = vmatprep.subr.mxu0 0.0
  %759 = vmatpush1.msra.mxu0 0.0
  %760 = vmatprep.subr.mxu0 0.0
  %761 = vmatpush1.msra.mxu0 0.0
  %762 = vmatprep.subr.mxu0 0.0
  %763 = vmatpush1.msra.mxu0 0.0
  %764 = vmatprep.subr.mxu0 0.0
  %765 = vmatpush1.msra.mxu0 0.0
  %766 = vmatprep.subr.mxu0 0.0
  %767 = vmatpush1.msra.mxu0 0.0
  %768 = vmatprep.subr.mxu0 0.0
  %769 = vmatpush1.msra.mxu0 0.0
  %770 = vmatprep.subr.mxu0 0.0
  %771 = vmatpush1.msra.mxu0 0.0
  %772 = vmatprep.subr.mxu0 0.0
  %773 = vmatpush1.msra.mxu0 0.0
  %774 = vmatprep.subr.mxu0 0.0
  %775 = vmatpush1.msra.mxu0 0.0
  %776 = vmatprep.subr.mxu0 0.0
  %777 = vmatpush1.msra.mxu0 0.0
  %778 = vmatprep.subr.mxu0 0.0
  %779 = vmatpush1.msra.mxu0 0.0
  %780 = vmatprep.subr.mxu0 0.0
  %781 = vmatpush1.msra.mxu0 0.0
  %782 = vmatprep.subr.mxu0 0.0
  %783 = vmatpush1.msra.mxu0 0.0
  %784 = vmatprep.subr.mxu0 0.0
  %785 = vmatpush1.msra.mxu0 0.0
  %786 = vmatprep.mubr.f32.mxu0 0.0
  %787 = vmatmul.mubr.f32.gmra.mrb[0].mxu0 %v690
  %v788 = vpop.f32.mrb[0].mxu0
  %v789 = vadd.f32 0.0, %v788
  %v790 = vpop.f32.mrb[0].mxu0
  %791 = vmatprep.mubr.f32.mxu0 0.0
  %792 = vmatmul.mubr.f32.gmra.mrb[0].mxu0 %v692
  %v793 = vpop.f32.mrb[0].mxu0
  %v794 = vadd.f32 0.0, %v793
  %v795 = vpop.f32.mrb[0].mxu0
  %796 = vmatprep.mubr.f32.mxu0 0.0
  %797 = vmatmul.mubr.f32.gmra.mrb[0].mxu0 %v694
  %v798 = vpop.f32.mrb[0].mxu0
  %v799 = vadd.f32 0.0, %v798
  %v800 = vpop.f32.mrb[0].mxu0
  %801 = vmatprep.mubr.f32.mxu0 0.0
  %802 = vmatmul.mubr.f32.gmra.mrb[0].mxu0 %v696
  %v803 = vpop.f32.mrb[0].mxu0
  %v804 = vadd.f32 0.0, %v803
  %v805 = vpop.f32.mrb[0].mxu0
  %806 = vmatprep.mubr.f32.mxu0 0.0
  %807 = vmatmul.mubr.f32.gmra.mrb[0].mxu0 %v698
  %v808 = vpop.f32.mrb[0].mxu0
  %v809 = vadd.f32 0.0, %v808
  %v810 = vpop.f32.mrb[0].mxu0
  %811 = vmatprep.mubr.f32.mxu0 0.0
  %812 = vmatmul.mubr.f32.gmra.mrb[0].mxu0 %v700
  %v813 = vpop.f32.mrb[0].mxu0
  %v814 = vadd.f32 0.0, %v813
  %v815 = vpop.f32.mrb[0].mxu0
  %816 = vmatprep.mubr.f32.mxu0 0.0
  %817 = vmatmul.mubr.f32.gmra.mrb[0].mxu0 %v702
  %v818 = vpop.f32.mrb[0].mxu0
  %v819 = vadd.f32 0.0, %v818
  %v820 = vpop.f32.mrb[0].mxu0
  %821 = vmatprep.mubr.f32.mxu0 0.0
  %822 = vmatmul.mubr.f32.gmra.mrb[0].mxu0 %v704
  %v823 = vpop.f32.mrb[0].mxu0
  %v824 = vadd.f32 0.0, %v823
  %v825 = vpop.f32.mrb[0].mxu0
  %826 = vmatprep.mubr.f32.mxu0 0.0
  %827 = vmatmul.mubr.f32.gmra.mrb[0].mxu0 %v706
  %v828 = vpop.f32.mrb[0].mxu0
  %v829 = vadd.f32 0.0, %v828
  %v830 = vpop.f32.mrb[0].mxu0
  %831 = vmatprep.mubr.f32.mxu0 0.0
  %832 = vmatmul.mubr.f32.gmra.mrb[0].mxu0 %v708
  %v833 = vpop.f32.mrb[0].mxu0
  %v834 = vadd.f32 0.0, %v833
  %v835 = vpop.f32.mrb[0].mxu0
  %836 = vmatprep.mubr.f32.mxu0 0.0
  %837 = vmatmul.mubr.f32.gmra.mrb[0].mxu0 %v710
  %v838 = vpop.f32.mrb[0].mxu0
  %v839 = vadd.f32 0.0, %v838
  %v840 = vpop.f32.mrb[0].mxu0
  %841 = vmatprep.mubr.f32.mxu0 0.0
  %842 = vmatmul.mubr.f32.gmra.mrb[0].mxu0 %v712
  %v843 = vpop.f32.mrb[0].mxu0
  %v844 = vadd.f32 0.0, %v843
  %v845 = vpop.f32.mrb[0].mxu0
  %846 = vmatprep.mubr.f32.mxu0 0.0
  %847 = vmatmul.mubr.f32.gmra.mrb[0].mxu0 %v714
  %v848 = vpop.f32.mrb[0].mxu0
  %v849 = vadd.f32 0.0, %v848
  %v850 = vpop.f32.mrb[0].mxu0
  %851 = vmatprep.mubr.f32.mxu0 0.0
  %852 = vmatmul.mubr.f32.gmra.mrb[0].mxu0 %v716
  %v853 = vpop.f32.mrb[0].mxu0
  %v854 = vadd.f32 0.0, %v853
  %v855 = vpop.f32.mrb[0].mxu0
  %856 = vmatprep.mubr.f32.mxu0 0.0
  %857 = vmatmul.mubr.f32.gmra.mrb[0].mxu0 %v718
  %v858 = vpop.f32.mrb[0].mxu0
  %v859 = vadd.f32 0.0, %v858
  %v860 = vpop.f32.mrb[0].mxu0
  %861 = vmatprep.mubr.f32.mxu0 0.0
  %862 = vmatmul.mubr.f32.gmra.mrb[0].mxu0 %v720
  %v863 = vpop.f32.mrb[0].mxu0
  %v864 = vadd.f32 0.0, %v863
  %v865 = vpop.f32.mrb[0].mxu0
  %866 = vdwg.mxu0
  %v867 = vadd.f32 %v567, %v789
  %v868 = vadd.f32 %v572, %v794
  %v869 = vadd.f32 %v577, %v799
  %v870 = vadd.f32 %v582, %v804
  %v871 = vadd.f32 %v587, %v809
  %v872 = vadd.f32 %v592, %v814
  %v873 = vadd.f32 %v597, %v819
  %v874 = vadd.f32 %v602, %v824
  %v875 = vadd.f32 %v607, %v829
  %v876 = vadd.f32 %v612, %v834
  %v877 = vadd.f32 %v617, %v839
  %v878 = vadd.f32 %v622, %v844
  %v879 = vadd.f32 %v627, %v849
  %v880 = vadd.f32 %v632, %v854
  %v881 = vadd.f32 %v637, %v859
  %v882 = vadd.f32 %v642, %v864
  %v883 = vld [vmem:[%s5] sm:$0x1]
  %v885 = vlaneseq
  %v886 = vshrl.u32 %v885, 7
  %v887 = vsub.s32 0, %v886
  %v888 = vrot.slane %v883, %v887
  %v890 = vadd.f32 %v867, %v888
  %v891 = vadd.f32 %v868, %v888
  %v892 = vadd.f32 %v869, %v888
  %v893 = vadd.f32 %v870, %v888
  %v894 = vadd.f32 %v871, %v888
  %v895 = vadd.f32 %v872, %v888
  %v896 = vadd.f32 %v873, %v888
  %v897 = vadd.f32 %v874, %v888
  %v898 = vadd.f32 %v875, %v888
  %v899 = vadd.f32 %v876, %v888
  %v900 = vadd.f32 %v877, %v888
  %v901 = vadd.f32 %v878, %v888
  %v902 = vadd.f32 %v879, %v888
  %v903 = vadd.f32 %v880, %v888
  %v904 = vadd.f32 %v881, %v888
  %v905 = vadd.f32 %v882, %v888
  %v906 = vsel %vm48, %v890, -inf
  %v907 = vsel %vm48, %v891, -inf
  %v908 = vmax.f32 %v906, %v907
  %v909 = vrot.slane %v908, 4
  %v910 = vmax.f32 %v908, %v909
  %v911 = vrot.slane %v910, 2
  %v912 = vmax.f32 %v910, %v911
  %v913 = vrot.slane %v912, 1
  %v914 = vmax.f32 %v912, %v913
  %v915 = vsel %vm48, %v892, -inf
  %v916 = vsel %vm48, %v893, -inf
  %v917 = vmax.f32 %v915, %v916
  %v918 = vrot.slane %v917, 4
  %v919 = vmax.f32 %v917, %v918
  %v920 = vrot.slane %v919, 2
  %v921 = vmax.f32 %v919, %v920
  %v922 = vrot.slane %v921, 1
  %v923 = vmax.f32 %v921, %v922
  %v924 = vsel %vm48, %v894, -inf
  %v925 = vsel %vm48, %v895, -inf
  %v926 = vmax.f32 %v924, %v925
  %v927 = vrot.slane %v926, 4
  %v928 = vmax.f32 %v926, %v927
  %v929 = vrot.slane %v928, 2
  %v930 = vmax.f32 %v928, %v929
  %v931 = vrot.slane %v930, 1
  %v932 = vmax.f32 %v930, %v931
  %v933 = vsel %vm48, %v896, -inf
  %v934 = vsel %vm48, %v897, -inf
  %v935 = vmax.f32 %v933, %v934
  %v936 = vrot.slane %v935, 4
  %v937 = vmax.f32 %v935, %v936
  %v938 = vrot.slane %v937, 2
  %v939 = vmax.f32 %v937, %v938
  %v940 = vrot.slane %v939, 1
  %v941 = vmax.f32 %v939, %v940
  %v942 = vsel %vm48, %v898, -inf
  %v943 = vsel %vm48, %v899, -inf
  %v944 = vmax.f32 %v942, %v943
  %v945 = vrot.slane %v944, 4
  %v946 = vmax.f32 %v944, %v945
  %v947 = vrot.slane %v946, 2
  %v948 = vmax.f32 %v946, %v947
  %v949 = vrot.slane %v948, 1
  %v950 = vmax.f32 %v948, %v949
  %v951 = vsel %vm48, %v900, -inf
  %v952 = vsel %vm48, %v901, -inf
  %v953 = vmax.f32 %v951, %v952
  %v954 = vrot.slane %v953, 4
  %v955 = vmax.f32 %v953, %v954
  %v956 = vrot.slane %v955, 2
  %v957 = vmax.f32 %v955, %v956
  %v958 = vrot.slane %v957, 1
  %v959 = vmax.f32 %v957, %v958
  %v960 = vsel %vm48, %v902, -inf
  %v961 = vsel %vm48, %v903, -inf
  %v962 = vmax.f32 %v960, %v961
  %v963 = vrot.slane %v962, 4
  %v964 = vmax.f32 %v962, %v963
  %v965 = vrot.slane %v964, 2
  %v966 = vmax.f32 %v964, %v965
  %v967 = vrot.slane %v966, 1
  %v968 = vmax.f32 %v966, %v967
  %v969 = vsel %vm48, %v904, -inf
  %v970 = vsel %vm48, %v905, -inf
  %v971 = vmax.f32 %v969, %v970
  %v972 = vrot.slane %v971, 4
  %v973 = vmax.f32 %v971, %v972
  %v974 = vrot.slane %v973, 2
  %v975 = vmax.f32 %v973, %v974
  %v976 = vrot.slane %v975, 1
  %v977 = vmax.f32 %v975, %v976
  %v978 = vmul.f32 %v178, %v914
  %v979 = vmul.f32 %v179, %v923
  %v980 = vmul.f32 %v180, %v932
  %v981 = vmul.f32 %v181, %v941
  %v982 = vmul.f32 %v182, %v950
  %v983 = vmul.f32 %v183, %v959
  %v984 = vmul.f32 %v184, %v968
  %v985 = vmul.f32 %v185, %v977
  %v986 = vsel %vm48, %v978, 0.0
  %987 = vadd.xlane.f32.xlu0 %v986
  %v988 = vpop.xlane.xlu0 %987
  %v989 = vsel %vm48, %v979, 0.0
  %990 = vadd.xlane.f32.xlu0 %v989
  %v991 = vpop.xlane.xlu0 %990
  %v992 = vsel %vm48, %v980, 0.0
  %993 = vadd.xlane.f32.xlu0 %v992
  %v994 = vpop.xlane.xlu0 %993
  %v995 = vsel %vm48, %v981, 0.0
  %996 = vadd.xlane.f32.xlu0 %v995
  %v997 = vpop.xlane.xlu0 %996
  %v998 = vsel %vm48, %v982, 0.0
  %999 = vadd.xlane.f32.xlu0 %v998
  %v1000 = vpop.xlane.xlu0 %999
  %v1001 = vsel %vm48, %v983, 0.0
  %1002 = vadd.xlane.f32.xlu0 %v1001
  %v1003 = vpop.xlane.xlu0 %1002
  %v1004 = vsel %vm48, %v984, 0.0
  %1005 = vadd.xlane.f32.xlu0 %v1004
  %v1006 = vpop.xlane.xlu0 %1005
  %v1007 = vsel %vm48, %v985, 0.0
  %1008 = vadd.xlane.f32.xlu0 %v1007
  %v1009 = vpop.xlane.xlu0 %1008
  %v1010 = vmul.f32 %v178, %v178
  %v1011 = vmul.f32 %v179, %v179
  %v1012 = vmul.f32 %v180, %v180
  %v1013 = vmul.f32 %v181, %v181
  %v1014 = vmul.f32 %v182, %v182
  %v1015 = vmul.f32 %v183, %v183
  %v1016 = vmul.f32 %v184, %v184
  %v1017 = vmul.f32 %v185, %v185
  %v1018 = vsel %vm48, %v1010, 0.0
  %1019 = vadd.xlane.f32.xlu0 %v1018
  %v1020 = vpop.xlane.xlu0 %1019
  %v1021 = vsel %vm48, %v1011, 0.0
  %1022 = vadd.xlane.f32.xlu0 %v1021
  %v1023 = vpop.xlane.xlu0 %1022
  %v1024 = vsel %vm48, %v1012, 0.0
  %1025 = vadd.xlane.f32.xlu0 %v1024
  %v1026 = vpop.xlane.xlu0 %1025
  %v1027 = vsel %vm48, %v1013, 0.0
  %1028 = vadd.xlane.f32.xlu0 %v1027
  %v1029 = vpop.xlane.xlu0 %1028
  %v1030 = vsel %vm48, %v1014, 0.0
  %1031 = vadd.xlane.f32.xlu0 %v1030
  %v1032 = vpop.xlane.xlu0 %1031
  %v1033 = vsel %vm48, %v1015, 0.0
  %1034 = vadd.xlane.f32.xlu0 %v1033
  %v1035 = vpop.xlane.xlu0 %1034
  %v1036 = vsel %vm48, %v1016, 0.0
  %1037 = vadd.xlane.f32.xlu0 %v1036
  %v1038 = vpop.xlane.xlu0 %1037
  %v1039 = vsel %vm48, %v1017, 0.0
  %1040 = vadd.xlane.f32.xlu0 %v1039
  %v1041 = vpop.xlane.xlu0 %1040
  %v1042 = vmul.f32 %v914, %v914
  %v1043 = vmul.f32 %v923, %v923
  %v1044 = vmul.f32 %v932, %v932
  %v1045 = vmul.f32 %v941, %v941
  %v1046 = vmul.f32 %v950, %v950
  %v1047 = vmul.f32 %v959, %v959
  %v1048 = vmul.f32 %v968, %v968
  %v1049 = vmul.f32 %v977, %v977
  %vm1058 = vcmask 1041409
  %v1059 = vsel %vm1058, %v1043, %v1042
  %vm1060 = vcmask 1042434
  %v1061 = vsel %vm1060, %v1044, %v1059
  %vm1062 = vcmask 1043459
  %v1063 = vsel %vm1062, %v1045, %v1061
  %vm1064 = vcmask 1044484
  %v1065 = vsel %vm1064, %v1046, %v1063
  %vm1066 = vcmask 1045509
  %v1067 = vsel %vm1066, %v1047, %v1065
  %vm1068 = vcmask 1046534
  %v1069 = vsel %vm1068, %v1048, %v1067
  %vm1070 = vcmask 1047559
  %v1071 = vsel %vm1070, %v1049, %v1069
  %v1073 = vsel %vm48, %v1071, 0.0
  %1074 = vadd.xlane.f32.xlu0 %v1073
  %v1075 = vpop.xlane.xlu0 %1074
  %v1076 = vrsqrt.pop %v1020
  %v1077 = vrsqrt.pop %v1023
  %v1078 = vrsqrt.pop %v1026
  %v1079 = vrsqrt.pop %v1029
  %v1080 = vrsqrt.pop %v1032
  %v1081 = vrsqrt.pop %v1035
  %v1082 = vrsqrt.pop %v1038
  %v1083 = vrsqrt.pop %v1041
  %v1084 = vmin.f32 %v1076, 1e+08
  %v1085 = vmin.f32 %v1077, 1e+08
  %v1086 = vmin.f32 %v1078, 1e+08
  %v1087 = vmin.f32 %v1079, 1e+08
  %v1088 = vmin.f32 %v1080, 1e+08
  %v1089 = vmin.f32 %v1081, 1e+08
  %v1090 = vmin.f32 %v1082, 1e+08
  %v1091 = vmin.f32 %v1083, 1e+08
  %v1092 = vrsqrt.pop %v1075
  %v1093 = vmin.f32 %v1092, 1e+08
  %v1094 = vmul.f32 %v988, %v1084
  %v1095 = vmul.f32 %v991, %v1085
  %v1096 = vmul.f32 %v994, %v1086
  %v1097 = vmul.f32 %v997, %v1087
  %v1098 = vmul.f32 %v1000, %v1088
  %v1099 = vmul.f32 %v1003, %v1089
  %v1100 = vmul.f32 %v1006, %v1090
  %v1101 = vmul.f32 %v1009, %v1091
  %v1103 = vlaneseq
  %v1104 = vshrl.u32 %v1103, 7
  %v1105 = vsub.s32 0, %v1104
  %v1106 = vrot.slane %v1093, %v1105
  %v1107 = vlaneseq
  %v1108 = vshrl.u32 %v1107, 7
  %v1109 = vsub.s32 1, %v1108
  %v1110 = vrot.slane %v1093, %v1109
  %v1111 = vlaneseq
  %v1112 = vshrl.u32 %v1111, 7
  %v1113 = vsub.s32 2, %v1112
  %v1114 = vrot.slane %v1093, %v1113
  %v1115 = vlaneseq
  %v1116 = vshrl.u32 %v1115, 7
  %v1117 = vsub.s32 3, %v1116
  %v1118 = vrot.slane %v1093, %v1117
  %v1119 = vlaneseq
  %v1120 = vshrl.u32 %v1119, 7
  %v1121 = vsub.s32 4, %v1120
  %v1122 = vrot.slane %v1093, %v1121
  %v1123 = vlaneseq
  %v1124 = vshrl.u32 %v1123, 7
  %v1125 = vsub.s32 5, %v1124
  %v1126 = vrot.slane %v1093, %v1125
  %v1127 = vlaneseq
  %v1128 = vshrl.u32 %v1127, 7
  %v1129 = vsub.s32 6, %v1128
  %v1130 = vrot.slane %v1093, %v1129
  %v1131 = vlaneseq
  %v1132 = vshrl.u32 %v1131, 7
  %v1133 = vsub.s32 7, %v1132
  %v1134 = vrot.slane %v1093, %v1133
  %v1143 = vmul.f32 %v1094, %v1106
  %v1144 = vmul.f32 %v1095, %v1110
  %v1145 = vmul.f32 %v1096, %v1114
  %v1146 = vmul.f32 %v1097, %v1118
  %v1147 = vmul.f32 %v1098, %v1122
  %v1148 = vmul.f32 %v1099, %v1126
  %v1149 = vmul.f32 %v1100, %v1130
  %v1150 = vmul.f32 %v1101, %v1134
  %s1151 = sld [smem:[#allocation2]]
  %v1152 = vstv %s1151
  %v1153 = vmul.f32 %v1143, %v1152
  %v1154 = vmul.f32 %v1144, %v1152
  %v1155 = vmul.f32 %v1145, %v1152
  %v1156 = vmul.f32 %v1146, %v1152
  %v1157 = vmul.f32 %v1147, %v1152
  %v1158 = vmul.f32 %v1148, %v1152
  %v1159 = vmul.f32 %v1149, %v1152
  %v1160 = vmul.f32 %v1150, %v1152
  %1169 = vset.pattern.permute.xlu0 0
  %1170 = vperm.xlu0 %1169, %v1153
  %v1171 = vpop.permute.xlu0 %1170
  %1172 = vset.pattern.permute.xlu0 0
  %1173 = vperm.xlu0 %1172, %v1154
  %v1174 = vpop.permute.xlu0 %1173
  %1175 = vset.pattern.permute.xlu0 0
  %1176 = vperm.xlu0 %1175, %v1155
  %v1177 = vpop.permute.xlu0 %1176
  %1178 = vset.pattern.permute.xlu0 0
  %1179 = vperm.xlu0 %1178, %v1156
  %v1180 = vpop.permute.xlu0 %1179
  %1181 = vset.pattern.permute.xlu0 0
  %1182 = vperm.xlu0 %1181, %v1157
  %v1183 = vpop.permute.xlu0 %1182
  %1184 = vset.pattern.permute.xlu0 0
  %1185 = vperm.xlu0 %1184, %v1158
  %v1186 = vpop.permute.xlu0 %1185
  %1187 = vset.pattern.permute.xlu0 0
  %1188 = vperm.xlu0 %1187, %v1159
  %v1189 = vpop.permute.xlu0 %1188
  %1190 = vset.pattern.permute.xlu0 0
  %1191 = vperm.xlu0 %1190, %v1160
  %v1192 = vpop.permute.xlu0 %1191
  %v1193 = vlaneseq
  %v1194 = vand.u32 %v1193, 127
  %v1195 = vlaneseq
  %v1196 = vshrl.u32 %v1195, 7
  %v1197 = vsub.s32 %v1194, %v1196
  %v1198 = vrot.slane %v1171, %v1197
  %v1199 = vlaneseq
  %v1200 = vshrl.u32 %v1199, 7
  %v1201 = vsub.s32 %v1194, %v1200
  %v1202 = vrot.slane %v1174, %v1201
  %v1203 = vlaneseq
  %v1204 = vshrl.u32 %v1203, 7
  %v1205 = vsub.s32 %v1194, %v1204
  %v1206 = vrot.slane %v1177, %v1205
  %v1207 = vlaneseq
  %v1208 = vshrl.u32 %v1207, 7
  %v1209 = vsub.s32 %v1194, %v1208
  %v1210 = vrot.slane %v1180, %v1209
  %v1211 = vlaneseq
  %v1212 = vshrl.u32 %v1211, 7
  %v1213 = vsub.s32 %v1194, %v1212
  %v1214 = vrot.slane %v1183, %v1213
  %v1215 = vlaneseq
  %v1216 = vshrl.u32 %v1215, 7
  %v1217 = vsub.s32 %v1194, %v1216
  %v1218 = vrot.slane %v1186, %v1217
  %v1219 = vlaneseq
  %v1220 = vshrl.u32 %v1219, 7
  %v1221 = vsub.s32 %v1194, %v1220
  %v1222 = vrot.slane %v1189, %v1221
  %v1223 = vlaneseq
  %v1224 = vshrl.u32 %v1223, 7
  %v1225 = vsub.s32 %v1194, %v1224
  %v1226 = vrot.slane %v1192, %v1225
  %v1227 = vsel %vm1058, %v1202, %v1198
  %v1228 = vsel %vm1060, %v1206, %v1227
  %v1229 = vsel %vm1062, %v1210, %v1228
  %v1230 = vsel %vm1064, %v1214, %v1229
  %v1231 = vsel %vm1066, %v1218, %v1230
  %v1232 = vsel %vm1068, %v1222, %v1231
  %v1233 = vsel %vm1070, %v1226, %v1232
  %vm1235 = vcmask 64512
  %v1236 = vsel %vm1235, %v1233, -inf
  %1237 = vmax.xlane.f32.xlu0 %v1236
  %v1238 = vpop.xlane.xlu0 %1237
  %v1240 = vlaneseq
  %v1241 = vshrl.u32 %v1240, 7
  %v1242 = vsub.s32 0, %v1241
  %v1243 = vrot.slane %v1238, %v1242
  %v1244 = vlaneseq
  %v1245 = vshrl.u32 %v1244, 7
  %v1246 = vsub.s32 1, %v1245
  %v1247 = vrot.slane %v1238, %v1246
  %v1248 = vlaneseq
  %v1249 = vshrl.u32 %v1248, 7
  %v1250 = vsub.s32 2, %v1249
  %v1251 = vrot.slane %v1238, %v1250
  %v1252 = vlaneseq
  %v1253 = vshrl.u32 %v1252, 7
  %v1254 = vsub.s32 3, %v1253
  %v1255 = vrot.slane %v1238, %v1254
  %v1256 = vlaneseq
  %v1257 = vshrl.u32 %v1256, 7
  %v1258 = vsub.s32 4, %v1257
  %v1259 = vrot.slane %v1238, %v1258
  %v1260 = vlaneseq
  %v1261 = vshrl.u32 %v1260, 7
  %v1262 = vsub.s32 5, %v1261
  %v1263 = vrot.slane %v1238, %v1262
  %v1264 = vlaneseq
  %v1265 = vshrl.u32 %v1264, 7
  %v1266 = vsub.s32 6, %v1265
  %v1267 = vrot.slane %v1238, %v1266
  %v1268 = vlaneseq
  %v1269 = vshrl.u32 %v1268, 7
  %v1270 = vsub.s32 7, %v1269
  %v1271 = vrot.slane %v1238, %v1270
  %v1280 = vsub.f32 %v1153, %v1243
  %v1281 = vsub.f32 %v1154, %v1247
  %v1282 = vsub.f32 %v1155, %v1251
  %v1283 = vsub.f32 %v1156, %v1255
  %v1284 = vsub.f32 %v1157, %v1259
  %v1285 = vsub.f32 %v1158, %v1263
  %v1286 = vsub.f32 %v1159, %v1267
  %v1287 = vsub.f32 %v1160, %v1271
  %v1288 = vmul.f32 %v1280, 1.442695
  %v1289 = vpow.pop %v1288
  %v1290 = vmul.f32 %v1281, 1.442695
  %v1291 = vpow.pop %v1290
  %v1292 = vmul.f32 %v1282, 1.442695
  %v1293 = vpow.pop %v1292
  %v1294 = vmul.f32 %v1283, 1.442695
  %v1295 = vpow.pop %v1294
  %v1296 = vmul.f32 %v1284, 1.442695
  %v1297 = vpow.pop %v1296
  %v1298 = vmul.f32 %v1285, 1.442695
  %v1299 = vpow.pop %v1298
  %v1300 = vmul.f32 %v1286, 1.442695
  %v1301 = vpow.pop %v1300
  %v1302 = vmul.f32 %v1287, 1.442695
  %v1303 = vpow.pop %v1302
  %1312 = vset.pattern.permute.xlu0 0
  %1313 = vperm.xlu0 %1312, %v1289
  %v1314 = vpop.permute.xlu0 %1313
  %1315 = vset.pattern.permute.xlu0 0
  %1316 = vperm.xlu0 %1315, %v1291
  %v1317 = vpop.permute.xlu0 %1316
  %1318 = vset.pattern.permute.xlu0 0
  %1319 = vperm.xlu0 %1318, %v1293
  %v1320 = vpop.permute.xlu0 %1319
  %1321 = vset.pattern.permute.xlu0 0
  %1322 = vperm.xlu0 %1321, %v1295
  %v1323 = vpop.permute.xlu0 %1322
  %1324 = vset.pattern.permute.xlu0 0
  %1325 = vperm.xlu0 %1324, %v1297
  %v1326 = vpop.permute.xlu0 %1325
  %1327 = vset.pattern.permute.xlu0 0
  %1328 = vperm.xlu0 %1327, %v1299
  %v1329 = vpop.permute.xlu0 %1328
  %1330 = vset.pattern.permute.xlu0 0
  %1331 = vperm.xlu0 %1330, %v1301
  %v1332 = vpop.permute.xlu0 %1331
  %1333 = vset.pattern.permute.xlu0 0
  %1334 = vperm.xlu0 %1333, %v1303
  %v1335 = vpop.permute.xlu0 %1334
  %v1336 = vlaneseq
  %v1337 = vshrl.u32 %v1336, 7
  %v1338 = vsub.s32 %v1194, %v1337
  %v1339 = vrot.slane %v1314, %v1338
  %v1340 = vlaneseq
  %v1341 = vshrl.u32 %v1340, 7
  %v1342 = vsub.s32 %v1194, %v1341
  %v1343 = vrot.slane %v1317, %v1342
  %v1344 = vlaneseq
  %v1345 = vshrl.u32 %v1344, 7
  %v1346 = vsub.s32 %v1194, %v1345
  %v1347 = vrot.slane %v1320, %v1346
  %v1348 = vlaneseq
  %v1349 = vshrl.u32 %v1348, 7
  %v1350 = vsub.s32 %v1194, %v1349
  %v1351 = vrot.slane %v1323, %v1350
  %v1352 = vlaneseq
  %v1353 = vshrl.u32 %v1352, 7
  %v1354 = vsub.s32 %v1194, %v1353
  %v1355 = vrot.slane %v1326, %v1354
  %v1356 = vlaneseq
  %v1357 = vshrl.u32 %v1356, 7
  %v1358 = vsub.s32 %v1194, %v1357
  %v1359 = vrot.slane %v1329, %v1358
  %v1360 = vlaneseq
  %v1361 = vshrl.u32 %v1360, 7
  %v1362 = vsub.s32 %v1194, %v1361
  %v1363 = vrot.slane %v1332, %v1362
  %v1364 = vlaneseq
  %v1365 = vshrl.u32 %v1364, 7
  %v1366 = vsub.s32 %v1194, %v1365
  %v1367 = vrot.slane %v1335, %v1366
  %v1368 = vsel %vm1058, %v1343, %v1339
  %v1369 = vsel %vm1060, %v1347, %v1368
  %v1370 = vsel %vm1062, %v1351, %v1369
  %v1371 = vsel %vm1064, %v1355, %v1370
  %v1372 = vsel %vm1066, %v1359, %v1371
  %v1373 = vsel %vm1068, %v1363, %v1372
  %v1374 = vsel %vm1070, %v1367, %v1373
  %v1376 = vsel %vm1235, %v1374, 0.0
  %1377 = vadd.xlane.f32.xlu0 %v1376
  %v1378 = vpop.xlane.xlu0 %1377
  %v1379 = vlog2.pop %v1378
  %v1380 = vmul.f32 %v1379, 0.6931472
  %v1381 = vadd.f32 %v1238, %v1380
  %v1382 = vrot.slane %v1154, 7
  %v1383 = vsel %vm1058, %v1382, %v1153
  %v1384 = vrot.slane %v1155, 6
  %v1385 = vsel %vm1060, %v1384, %v1383
  %v1386 = vrot.slane %v1156, 5
  %v1387 = vsel %vm1062, %v1386, %v1385
  %v1388 = vrot.slane %v1157, 4
  %v1389 = vsel %vm1064, %v1388, %v1387
  %v1390 = vrot.slane %v1158, 3
  %v1391 = vsel %vm1066, %v1390, %v1389
  %v1392 = vrot.slane %v1159, 2
  %v1393 = vsel %vm1068, %v1392, %v1391
  %v1394 = vrot.slane %v1160, 1
  %v1395 = vsel %vm1070, %v1394, %v1393
  %v1397 = vsub.f32 %v1381, %v1395
  %vm1398 = vcmask 7168
  %1399 = vst.msk [vmem:[%s7] sm:$0xff] %vm1398, %v1397
  // Predicated region
  $region30: #{_single_forward.1} parent=0 // pred_check
    _
  $region31: #{_single_forward.1} parent=0 // pred_check_branch
    %1401 = sbr.rel (0) target = $region33
  $region32: #{_single_forward.1} parent=0 // pred_region
    _
  $region33: #{_single_forward.1} parent=0 // pred_fallthru
    _
  // Predicated region
  $region34: #{_single_forward.1} parent=0 // pred_check
    _
  $region35: #{_single_forward.1} parent=0 // pred_check_branch
    %1403 = sbr.rel (0) target = $region37
  $region36: #{_single_forward.1} parent=0 // pred_region
    _
  $region37: #{_single_forward.1} parent=0 // pred_fallthru
    _
  // Predicated region
  $region38: #{_single_forward.1} parent=0 // pred_check
    _
  $region39: #{_single_forward.1} parent=0 // pred_check_branch
    %1405 = sbr.rel (0) target = $region41
  $region40: #{_single_forward.1} parent=0 // pred_region
    _
  $region41: #{_single_forward.1} parent=0 // pred_fallthru
    _
  // Predicated region
  $region42: #{_single_forward.1} parent=0 // pred_check
    _
  $region43: #{_single_forward.1} parent=0 // pred_check_branch
    %1407 = sbr.rel (0) target = $region45
  $region44: #{_single_forward.1} parent=0 // pred_region
    _
  $region45: #{_single_forward.1} parent=0 // pred_fallthru
    _

</llo_original>
